<compile_context>
chip_gen: v7x
topology: tpu7x:2x2x1
jax: 0.10.0
libtpu: 0.0.40
codegen_flags: <defaults>
</compile_context>

<pallas_src>
import functools

import jax
import jax.numpy as jnp
from jax.experimental import pallas as pl
from jax.experimental.pallas import tpu as pltpu

D_IN, H1, H2, D_OUT = 2, 10, 10, 1
LANES = 128
CHUNK_ROWS = 16                              # (16, 128) f32 tile = 2 vregs per live value
SAMPLES_PER_CHUNK = CHUNK_ROWS * LANES       # 2048 samples per inner-loop chunk

# Packed-parameter layout (1-D SMEM array, avoids 2-D SMEM padding).
W1_OFF = 0
B1_OFF = W1_OFF + H1 * D_IN                  # 20
W2_OFF = B1_OFF + H1                         # 30
B2_OFF = W2_OFF + H2 * H1                    # 130
W3_OFF = B2_OFF + H2                         # 140
B3_OFF = W3_OFF + D_OUT * H2                 # 150
N_PARAMS = B3_OFF + D_OUT                    # 151


def mlp_kernel(p_ref, x_ref, o_ref, *, n_chunks):
    # p_ref: SMEM f32[151] packed params (w3/b3 already pre-scaled by 0.5).
    # x_ref: VMEM (2, block_rows, 128) -- (feature, sublane-row, lane).
    # o_ref: VMEM (block_rows, 128) lane-dense output slab.

    # Hoist every SMEM scalar read out of the row-chunk loop (loop-invariant).
    w1 = [[p_ref[W1_OFF + o * D_IN + i] for i in range(D_IN)] for o in range(H1)]
    b1 = [p_ref[B1_OFF + o] for o in range(H1)]
    w2 = [[p_ref[W2_OFF + o * H1 + i] for i in range(H1)] for o in range(H2)]
    b2 = [p_ref[B2_OFF + o] for o in range(H2)]
    w3 = [p_ref[W3_OFF + o] for o in range(H2)]      # = 0.5 * fc3 weight
    b3 = p_ref[B3_OFF]                               # = 0.5 * fc3 bias

    # Inner chunk loop bounds vreg liveness to ~16 live (16,128) tiles (~32 vregs).
    @pl.loop(0, n_chunks)
    def _(c):
        r0 = pl.multiple_of(c * CHUNK_ROWS, CHUNK_ROWS)
        x0 = x_ref[0, pl.ds(r0, CHUNK_ROWS), :]      # (16, 128) input channel 0
        x1 = x_ref[1, pl.ds(r0, CHUNK_ROWS), :]      # (16, 128) input channel 1

        # fc1 + ReLU: 10 channels, pure VPU broadcast FMAs.
        h1 = [
            jnp.maximum(x0 * w1[o][0] + x1 * w1[o][1] + b1[o], 0.0)
            for o in range(H1)
        ]

        # fc2 + ReLU fused with the fc3 contraction; 2-way split accumulators
        # break the serial add chains (keeps all 4 VALU slots fed).
        zA = jnp.zeros_like(x0) + b3
        zB = jnp.zeros_like(x0)
        for o in range(H2):
            w = w2[o]
            accA = ((h1[0] * w[0] + h1[1] * w[1])
                    + (h1[2] * w[2] + h1[3] * w[3])) + h1[4] * w[4]
            accB = ((h1[5] * w[5] + h1[6] * w[6])
                    + (h1[7] * w[7] + h1[8] * w[8])) + h1[9] * w[9]
            h2o = jnp.maximum(accA + accB + b2[o], 0.0)
            if o % 2 == 0:
                zA = zA + h2o * w3[o]
            else:
                zB = zB + h2o * w3[o]

        # z_half == 0.5 * (fc3 logits); sigmoid(z) = 0.5*tanh(z/2) + 0.5 (EUP slot).
        z_half = zA + zB
        o_ref[pl.ds(r0, CHUNK_ROWS), :] = 0.5 * jnp.tanh(z_half) + 0.5


def _pack_params(params):
    w1, b1, w2, b2, w3, b3 = params
    # Fold the sigmoid pre-scale (0.5) into fc3's weights/bias.
    return jnp.concatenate([
        w1.reshape(-1), b1.reshape(-1),
        w2.reshape(-1), b2.reshape(-1),
        (0.5 * w3).reshape(-1), (0.5 * b3).reshape(-1),
    ]).astype(jnp.float32)


@functools.partial(jax.jit, static_argnames=("max_block_rows",))
def priority_classifier(x, params, *, max_block_rows=512):
    """x: (B, 2) float32 -> (B, 1) float32 probabilities."""
    B, d_in = x.shape
    assert d_in == D_IN
    assert max_block_rows % CHUNK_ROWS == 0 and max_block_rows >= CHUNK_ROWS

    # Static block/grid sizing: big blocks to amortize per-step overhead, but force
    # >=2 grid steps when possible so v7x's two TensorCores both get work.
    n_chunks = -(-B // SAMPLES_PER_CHUNK)
    max_block_chunks = max_block_rows // CHUNK_ROWS
    g = -(-n_chunks // max_block_chunks)
    if g == 1 and n_chunks >= 2:
        g = 2
    block_chunks = -(-n_chunks // g)
    b_pad = g * block_chunks * SAMPLES_PER_CHUNK
    n_rows = b_pad // LANES
    block_rows = block_chunks * CHUNK_ROWS

    # Skip the pad copy entirely when the batch is already aligned.
    x_pad = x if b_pad == B else jnp.pad(x, ((0, b_pad - B), (0, 0)))
    # TODO(synk): on v5e the (B,2)->(2,B) transpose is an extra HBM round-trip of x;
    # an in-kernel XLU lane de-interleave of the natural layout could remove it.
    xt = x_pad.T.reshape(D_IN, n_rows, LANES)
    p = _pack_params(params)

    out = pl.pallas_call(
        functools.partial(mlp_kernel, n_chunks=block_chunks),
        out_shape=jax.ShapeDtypeStruct((n_rows, LANES), jnp.float32),
        grid=(g,),
        in_specs=[
            pl.BlockSpec(memory_space=pltpu.MemorySpace.SMEM),                  # params
            pl.BlockSpec((D_IN, block_rows, LANES), lambda i: (0, i, 0)),       # x
        ],
        out_specs=pl.BlockSpec((block_rows, LANES), lambda i: (i, 0)),
        compiler_params=pltpu.CompilerParams(
            dimension_semantics=("parallel",),
        ),
    )(p, xt)

    return out.reshape(-1)[:B].reshape(B, D_OUT)


def init_params(key):
    """PyTorch nn.Linear default init; weights kept in (out_features, in_features)."""
    def u(k, shape, fan_in):
        bound = 1.0 / jnp.sqrt(jnp.float32(fan_in))
        return jax.random.uniform(k, shape, jnp.float32, -bound, bound)

    ks = jax.random.split(key, 6)
    w1 = u(ks[0], (H1, D_IN), D_IN)
    b1 = u(ks[1], (H1,), D_IN)
    w2 = u(ks[2], (H2, H1), H1)
    b2 = u(ks[3], (H2,), H1)
    w3 = u(ks[4], (D_OUT, H2), H2)
    b3 = u(ks[5], (D_OUT,), H2)
    return (w1, b1, w2, b2, w3, b3)


def reference(x, params):
    w1, b1, w2, b2, w3, b3 = params
    h1 = jnp.maximum(x @ w1.T + b1, 0.0)
    h2 = jnp.maximum(h1 @ w2.T + b2, 0.0)
    return jax.nn.sigmoid(h2 @ w3.T + b3)


if __name__ == "__main__":
    key = jax.random.PRNGKey(0)
    kx, kp = jax.random.split(key)
    params = init_params(kp)

    # Ragged batch: exercises padding, the multi-chunk inner loop and a 2-step
    # "parallel" grid (both v7x TensorCores busy).
    B = 5000
    x = jax.random.normal(kx, (B, D_IN), jnp.float32)
    out = jax.block_until_ready(priority_classifier(x, params))
    ref = reference(x, params)
    assert out.shape == (B, D_OUT)
    assert bool(jnp.allclose(out, ref, atol=1e-5, rtol=1e-5)), float(
        jnp.max(jnp.abs(out - ref)))

    # Tiny batch: single grid step / single chunk fallback path.
    B2 = 100
    x2 = jax.random.normal(kx, (B2, D_IN), jnp.float32)
    out2 = jax.block_until_ready(priority_classifier(x2, params))
    ref2 = reference(x2, params)
    assert out2.shape == (B2, D_OUT)
    assert bool(jnp.allclose(out2, ref2, atol=1e-5, rtol=1e-5))

    print("KERNEL_OK")
</pallas_src>

<mosaic_0001>
module attributes {stable_mosaic.version = 11 : i64} {
  func.func @mlp_kernel(%arg0: i32, %arg1: memref<151xf32, #tpu.memory_space<smem>>, %arg2: memref<2x32x128xf32, #tpu.memory_space<vmem>>, %arg3: memref<32x128xf32, #tpu.memory_space<vmem>>) attributes {dimension_semantics = [#tpu.dimension_semantics<parallel>], iteration_bounds = array<i64: 2>, scalar_prefetch = 0 : i64, scratch_operands = 0 : i64, tpu.core_type = #tpu.core_type<tc>, window_params = [{transform_indices = @transform_0, window_bounds = array<i64: 151>}, {transform_indices = @transform_1, window_bounds = array<i64: 2, 32, 128>}, {transform_indices = @transform_2, window_bounds = array<i64: 32, 128>}]} {
    %c0 = arith.constant 0 : index
    %0 = memref.load %arg1[%c0] : memref<151xf32, #tpu.memory_space<smem>>
    %c1 = arith.constant 1 : index
    %1 = memref.load %arg1[%c1] : memref<151xf32, #tpu.memory_space<smem>>
    %c2 = arith.constant 2 : index
    %2 = memref.load %arg1[%c2] : memref<151xf32, #tpu.memory_space<smem>>
    %c3 = arith.constant 3 : index
    %3 = memref.load %arg1[%c3] : memref<151xf32, #tpu.memory_space<smem>>
    %c4 = arith.constant 4 : index
    %4 = memref.load %arg1[%c4] : memref<151xf32, #tpu.memory_space<smem>>
    %c5 = arith.constant 5 : index
    %5 = memref.load %arg1[%c5] : memref<151xf32, #tpu.memory_space<smem>>
    %c6 = arith.constant 6 : index
    %6 = memref.load %arg1[%c6] : memref<151xf32, #tpu.memory_space<smem>>
    %c7 = arith.constant 7 : index
    %7 = memref.load %arg1[%c7] : memref<151xf32, #tpu.memory_space<smem>>
    %c8 = arith.constant 8 : index
    %8 = memref.load %arg1[%c8] : memref<151xf32, #tpu.memory_space<smem>>
    %c9 = arith.constant 9 : index
    %9 = memref.load %arg1[%c9] : memref<151xf32, #tpu.memory_space<smem>>
    %c10 = arith.constant 10 : index
    %10 = memref.load %arg1[%c10] : memref<151xf32, #tpu.memory_space<smem>>
    %c11 = arith.constant 11 : index
    %11 = memref.load %arg1[%c11] : memref<151xf32, #tpu.memory_space<smem>>
    %c12 = arith.constant 12 : index
    %12 = memref.load %arg1[%c12] : memref<151xf32, #tpu.memory_space<smem>>
    %c13 = arith.constant 13 : index
    %13 = memref.load %arg1[%c13] : memref<151xf32, #tpu.memory_space<smem>>
    %c14 = arith.constant 14 : index
    %14 = memref.load %arg1[%c14] : memref<151xf32, #tpu.memory_space<smem>>
    %c15 = arith.constant 15 : index
    %15 = memref.load %arg1[%c15] : memref<151xf32, #tpu.memory_space<smem>>
    %c16 = arith.constant 16 : index
    %16 = memref.load %arg1[%c16] : memref<151xf32, #tpu.memory_space<smem>>
    %c17 = arith.constant 17 : index
    %17 = memref.load %arg1[%c17] : memref<151xf32, #tpu.memory_space<smem>>
    %c18 = arith.constant 18 : index
    %18 = memref.load %arg1[%c18] : memref<151xf32, #tpu.memory_space<smem>>
    %c19 = arith.constant 19 : index
    %19 = memref.load %arg1[%c19] : memref<151xf32, #tpu.memory_space<smem>>
    %c20 = arith.constant 20 : index
    %20 = memref.load %arg1[%c20] : memref<151xf32, #tpu.memory_space<smem>>
    %c21 = arith.constant 21 : index
    %21 = memref.load %arg1[%c21] : memref<151xf32, #tpu.memory_space<smem>>
    %c22 = arith.constant 22 : index
    %22 = memref.load %arg1[%c22] : memref<151xf32, #tpu.memory_space<smem>>
    %c23 = arith.constant 23 : index
    %23 = memref.load %arg1[%c23] : memref<151xf32, #tpu.memory_space<smem>>
    %c24 = arith.constant 24 : index
    %24 = memref.load %arg1[%c24] : memref<151xf32, #tpu.memory_space<smem>>
    %c25 = arith.constant 25 : index
    %25 = memref.load %arg1[%c25] : memref<151xf32, #tpu.memory_space<smem>>
    %c26 = arith.constant 26 : index
    %26 = memref.load %arg1[%c26] : memref<151xf32, #tpu.memory_space<smem>>
    %c27 = arith.constant 27 : index
    %27 = memref.load %arg1[%c27] : memref<151xf32, #tpu.memory_space<smem>>
    %c28 = arith.constant 28 : index
    %28 = memref.load %arg1[%c28] : memref<151xf32, #tpu.memory_space<smem>>
    %c29 = arith.constant 29 : index
    %29 = memref.load %arg1[%c29] : memref<151xf32, #tpu.memory_space<smem>>
    %c30 = arith.constant 30 : index
    %30 = memref.load %arg1[%c30] : memref<151xf32, #tpu.memory_space<smem>>
    %c31 = arith.constant 31 : index
    %31 = memref.load %arg1[%c31] : memref<151xf32, #tpu.memory_space<smem>>
    %c32 = arith.constant 32 : index
    %32 = memref.load %arg1[%c32] : memref<151xf32, #tpu.memory_space<smem>>
    %c33 = arith.constant 33 : index
    %33 = memref.load %arg1[%c33] : memref<151xf32, #tpu.memory_space<smem>>
    %c34 = arith.constant 34 : index
    %34 = memref.load %arg1[%c34] : memref<151xf32, #tpu.memory_space<smem>>
    %c35 = arith.constant 35 : index
    %35 = memref.load %arg1[%c35] : memref<151xf32, #tpu.memory_space<smem>>
    %c36 = arith.constant 36 : index
    %36 = memref.load %arg1[%c36] : memref<151xf32, #tpu.memory_space<smem>>
    %c37 = arith.constant 37 : index
    %37 = memref.load %arg1[%c37] : memref<151xf32, #tpu.memory_space<smem>>
    %c38 = arith.constant 38 : index
    %38 = memref.load %arg1[%c38] : memref<151xf32, #tpu.memory_space<smem>>
    %c39 = arith.constant 39 : index
    %39 = memref.load %arg1[%c39] : memref<151xf32, #tpu.memory_space<smem>>
    %c40 = arith.constant 40 : index
    %40 = memref.load %arg1[%c40] : memref<151xf32, #tpu.memory_space<smem>>
    %c41 = arith.constant 41 : index
    %41 = memref.load %arg1[%c41] : memref<151xf32, #tpu.memory_space<smem>>
    %c42 = arith.constant 42 : index
    %42 = memref.load %arg1[%c42] : memref<151xf32, #tpu.memory_space<smem>>
    %c43 = arith.constant 43 : index
    %43 = memref.load %arg1[%c43] : memref<151xf32, #tpu.memory_space<smem>>
    %c44 = arith.constant 44 : index
    %44 = memref.load %arg1[%c44] : memref<151xf32, #tpu.memory_space<smem>>
    %c45 = arith.constant 45 : index
    %45 = memref.load %arg1[%c45] : memref<151xf32, #tpu.memory_space<smem>>
    %c46 = arith.constant 46 : index
    %46 = memref.load %arg1[%c46] : memref<151xf32, #tpu.memory_space<smem>>
    %c47 = arith.constant 47 : index
    %47 = memref.load %arg1[%c47] : memref<151xf32, #tpu.memory_space<smem>>
    %c48 = arith.constant 48 : index
    %48 = memref.load %arg1[%c48] : memref<151xf32, #tpu.memory_space<smem>>
    %c49 = arith.constant 49 : index
    %49 = memref.load %arg1[%c49] : memref<151xf32, #tpu.memory_space<smem>>
    %c50 = arith.constant 50 : index
    %50 = memref.load %arg1[%c50] : memref<151xf32, #tpu.memory_space<smem>>
    %c51 = arith.constant 51 : index
    %51 = memref.load %arg1[%c51] : memref<151xf32, #tpu.memory_space<smem>>
    %c52 = arith.constant 52 : index
    %52 = memref.load %arg1[%c52] : memref<151xf32, #tpu.memory_space<smem>>
    %c53 = arith.constant 53 : index
    %53 = memref.load %arg1[%c53] : memref<151xf32, #tpu.memory_space<smem>>
    %c54 = arith.constant 54 : index
    %54 = memref.load %arg1[%c54] : memref<151xf32, #tpu.memory_space<smem>>
    %c55 = arith.constant 55 : index
    %55 = memref.load %arg1[%c55] : memref<151xf32, #tpu.memory_space<smem>>
    %c56 = arith.constant 56 : index
    %56 = memref.load %arg1[%c56] : memref<151xf32, #tpu.memory_space<smem>>
    %c57 = arith.constant 57 : index
    %57 = memref.load %arg1[%c57] : memref<151xf32, #tpu.memory_space<smem>>
    %c58 = arith.constant 58 : index
    %58 = memref.load %arg1[%c58] : memref<151xf32, #tpu.memory_space<smem>>
    %c59 = arith.constant 59 : index
    %59 = memref.load %arg1[%c59] : memref<151xf32, #tpu.memory_space<smem>>
    %c60 = arith.constant 60 : index
    %60 = memref.load %arg1[%c60] : memref<151xf32, #tpu.memory_space<smem>>
    %c61 = arith.constant 61 : index
    %61 = memref.load %arg1[%c61] : memref<151xf32, #tpu.memory_space<smem>>
    %c62 = arith.constant 62 : index
    %62 = memref.load %arg1[%c62] : memref<151xf32, #tpu.memory_space<smem>>
    %c63 = arith.constant 63 : index
    %63 = memref.load %arg1[%c63] : memref<151xf32, #tpu.memory_space<smem>>
    %c64 = arith.constant 64 : index
    %64 = memref.load %arg1[%c64] : memref<151xf32, #tpu.memory_space<smem>>
    %c65 = arith.constant 65 : index
    %65 = memref.load %arg1[%c65] : memref<151xf32, #tpu.memory_space<smem>>
    %c66 = arith.constant 66 : index
    %66 = memref.load %arg1[%c66] : memref<151xf32, #tpu.memory_space<smem>>
    %c67 = arith.constant 67 : index
    %67 = memref.load %arg1[%c67] : memref<151xf32, #tpu.memory_space<smem>>
    %c68 = arith.constant 68 : index
    %68 = memref.load %arg1[%c68] : memref<151xf32, #tpu.memory_space<smem>>
    %c69 = arith.constant 69 : index
    %69 = memref.load %arg1[%c69] : memref<151xf32, #tpu.memory_space<smem>>
    %c70 = arith.constant 70 : index
    %70 = memref.load %arg1[%c70] : memref<151xf32, #tpu.memory_space<smem>>
    %c71 = arith.constant 71 : index
    %71 = memref.load %arg1[%c71] : memref<151xf32, #tpu.memory_space<smem>>
    %c72 = arith.constant 72 : index
    %72 = memref.load %arg1[%c72] : memref<151xf32, #tpu.memory_space<smem>>
    %c73 = arith.constant 73 : index
    %73 = memref.load %arg1[%c73] : memref<151xf32, #tpu.memory_space<smem>>
    %c74 = arith.constant 74 : index
    %74 = memref.load %arg1[%c74] : memref<151xf32, #tpu.memory_space<smem>>
    %c75 = arith.constant 75 : index
    %75 = memref.load %arg1[%c75] : memref<151xf32, #tpu.memory_space<smem>>
    %c76 = arith.constant 76 : index
    %76 = memref.load %arg1[%c76] : memref<151xf32, #tpu.memory_space<smem>>
    %c77 = arith.constant 77 : index
    %77 = memref.load %arg1[%c77] : memref<151xf32, #tpu.memory_space<smem>>
    %c78 = arith.constant 78 : index
    %78 = memref.load %arg1[%c78] : memref<151xf32, #tpu.memory_space<smem>>
    %c79 = arith.constant 79 : index
    %79 = memref.load %arg1[%c79] : memref<151xf32, #tpu.memory_space<smem>>
    %c80 = arith.constant 80 : index
    %80 = memref.load %arg1[%c80] : memref<151xf32, #tpu.memory_space<smem>>
    %c81 = arith.constant 81 : index
    %81 = memref.load %arg1[%c81] : memref<151xf32, #tpu.memory_space<smem>>
    %c82 = arith.constant 82 : index
    %82 = memref.load %arg1[%c82] : memref<151xf32, #tpu.memory_space<smem>>
    %c83 = arith.constant 83 : index
    %83 = memref.load %arg1[%c83] : memref<151xf32, #tpu.memory_space<smem>>
    %c84 = arith.constant 84 : index
    %84 = memref.load %arg1[%c84] : memref<151xf32, #tpu.memory_space<smem>>
    %c85 = arith.constant 85 : index
    %85 = memref.load %arg1[%c85] : memref<151xf32, #tpu.memory_space<smem>>
    %c86 = arith.constant 86 : index
    %86 = memref.load %arg1[%c86] : memref<151xf32, #tpu.memory_space<smem>>
    %c87 = arith.constant 87 : index
    %87 = memref.load %arg1[%c87] : memref<151xf32, #tpu.memory_space<smem>>
    %c88 = arith.constant 88 : index
    %88 = memref.load %arg1[%c88] : memref<151xf32, #tpu.memory_space<smem>>
    %c89 = arith.constant 89 : index
    %89 = memref.load %arg1[%c89] : memref<151xf32, #tpu.memory_space<smem>>
    %c90 = arith.constant 90 : index
    %90 = memref.load %arg1[%c90] : memref<151xf32, #tpu.memory_space<smem>>
    %c91 = arith.constant 91 : index
    %91 = memref.load %arg1[%c91] : memref<151xf32, #tpu.memory_space<smem>>
    %c92 = arith.constant 92 : index
    %92 = memref.load %arg1[%c92] : memref<151xf32, #tpu.memory_space<smem>>
    %c93 = arith.constant 93 : index
    %93 = memref.load %arg1[%c93] : memref<151xf32, #tpu.memory_space<smem>>
    %c94 = arith.constant 94 : index
    %94 = memref.load %arg1[%c94] : memref<151xf32, #tpu.memory_space<smem>>
    %c95 = arith.constant 95 : index
    %95 = memref.load %arg1[%c95] : memref<151xf32, #tpu.memory_space<smem>>
    %c96 = arith.constant 96 : index
    %96 = memref.load %arg1[%c96] : memref<151xf32, #tpu.memory_space<smem>>
    %c97 = arith.constant 97 : index
    %97 = memref.load %arg1[%c97] : memref<151xf32, #tpu.memory_space<smem>>
    %c98 = arith.constant 98 : index
    %98 = memref.load %arg1[%c98] : memref<151xf32, #tpu.memory_space<smem>>
    %c99 = arith.constant 99 : index
    %99 = memref.load %arg1[%c99] : memref<151xf32, #tpu.memory_space<smem>>
    %c100 = arith.constant 100 : index
    %100 = memref.load %arg1[%c100] : memref<151xf32, #tpu.memory_space<smem>>
    %c101 = arith.constant 101 : index
    %101 = memref.load %arg1[%c101] : memref<151xf32, #tpu.memory_space<smem>>
    %c102 = arith.constant 102 : index
    %102 = memref.load %arg1[%c102] : memref<151xf32, #tpu.memory_space<smem>>
    %c103 = arith.constant 103 : index
    %103 = memref.load %arg1[%c103] : memref<151xf32, #tpu.memory_space<smem>>
    %c104 = arith.constant 104 : index
    %104 = memref.load %arg1[%c104] : memref<151xf32, #tpu.memory_space<smem>>
    %c105 = arith.constant 105 : index
    %105 = memref.load %arg1[%c105] : memref<151xf32, #tpu.memory_space<smem>>
    %c106 = arith.constant 106 : index
    %106 = memref.load %arg1[%c106] : memref<151xf32, #tpu.memory_space<smem>>
    %c107 = arith.constant 107 : index
    %107 = memref.load %arg1[%c107] : memref<151xf32, #tpu.memory_space<smem>>
    %c108 = arith.constant 108 : index
    %108 = memref.load %arg1[%c108] : memref<151xf32, #tpu.memory_space<smem>>
    %c109 = arith.constant 109 : index
    %109 = memref.load %arg1[%c109] : memref<151xf32, #tpu.memory_space<smem>>
    %c110 = arith.constant 110 : index
    %110 = memref.load %arg1[%c110] : memref<151xf32, #tpu.memory_space<smem>>
    %c111 = arith.constant 111 : index
    %111 = memref.load %arg1[%c111] : memref<151xf32, #tpu.memory_space<smem>>
    %c112 = arith.constant 112 : index
    %112 = memref.load %arg1[%c112] : memref<151xf32, #tpu.memory_space<smem>>
    %c113 = arith.constant 113 : index
    %113 = memref.load %arg1[%c113] : memref<151xf32, #tpu.memory_space<smem>>
    %c114 = arith.constant 114 : index
    %114 = memref.load %arg1[%c114] : memref<151xf32, #tpu.memory_space<smem>>
    %c115 = arith.constant 115 : index
    %115 = memref.load %arg1[%c115] : memref<151xf32, #tpu.memory_space<smem>>
    %c116 = arith.constant 116 : index
    %116 = memref.load %arg1[%c116] : memref<151xf32, #tpu.memory_space<smem>>
    %c117 = arith.constant 117 : index
    %117 = memref.load %arg1[%c117] : memref<151xf32, #tpu.memory_space<smem>>
    %c118 = arith.constant 118 : index
    %118 = memref.load %arg1[%c118] : memref<151xf32, #tpu.memory_space<smem>>
    %c119 = arith.constant 119 : index
    %119 = memref.load %arg1[%c119] : memref<151xf32, #tpu.memory_space<smem>>
    %c120 = arith.constant 120 : index
    %120 = memref.load %arg1[%c120] : memref<151xf32, #tpu.memory_space<smem>>
    %c121 = arith.constant 121 : index
    %121 = memref.load %arg1[%c121] : memref<151xf32, #tpu.memory_space<smem>>
    %c122 = arith.constant 122 : index
    %122 = memref.load %arg1[%c122] : memref<151xf32, #tpu.memory_space<smem>>
    %c123 = arith.constant 123 : index
    %123 = memref.load %arg1[%c123] : memref<151xf32, #tpu.memory_space<smem>>
    %c124 = arith.constant 124 : index
    %124 = memref.load %arg1[%c124] : memref<151xf32, #tpu.memory_space<smem>>
    %c125 = arith.constant 125 : index
    %125 = memref.load %arg1[%c125] : memref<151xf32, #tpu.memory_space<smem>>
    %c126 = arith.constant 126 : index
    %126 = memref.load %arg1[%c126] : memref<151xf32, #tpu.memory_space<smem>>
    %c127 = arith.constant 127 : index
    %127 = memref.load %arg1[%c127] : memref<151xf32, #tpu.memory_space<smem>>
    %c128 = arith.constant 128 : index
    %128 = memref.load %arg1[%c128] : memref<151xf32, #tpu.memory_space<smem>>
    %c129 = arith.constant 129 : index
    %129 = memref.load %arg1[%c129] : memref<151xf32, #tpu.memory_space<smem>>
    %c130 = arith.constant 130 : index
    %130 = memref.load %arg1[%c130] : memref<151xf32, #tpu.memory_space<smem>>
    %c131 = arith.constant 131 : index
    %131 = memref.load %arg1[%c131] : memref<151xf32, #tpu.memory_space<smem>>
    %c132 = arith.constant 132 : index
    %132 = memref.load %arg1[%c132] : memref<151xf32, #tpu.memory_space<smem>>
    %c133 = arith.constant 133 : index
    %133 = memref.load %arg1[%c133] : memref<151xf32, #tpu.memory_space<smem>>
    %c134 = arith.constant 134 : index
    %134 = memref.load %arg1[%c134] : memref<151xf32, #tpu.memory_space<smem>>
    %c135 = arith.constant 135 : index
    %135 = memref.load %arg1[%c135] : memref<151xf32, #tpu.memory_space<smem>>
    %c136 = arith.constant 136 : index
    %136 = memref.load %arg1[%c136] : memref<151xf32, #tpu.memory_space<smem>>
    %c137 = arith.constant 137 : index
    %137 = memref.load %arg1[%c137] : memref<151xf32, #tpu.memory_space<smem>>
    %c138 = arith.constant 138 : index
    %138 = memref.load %arg1[%c138] : memref<151xf32, #tpu.memory_space<smem>>
    %c139 = arith.constant 139 : index
    %139 = memref.load %arg1[%c139] : memref<151xf32, #tpu.memory_space<smem>>
    %c140 = arith.constant 140 : index
    %140 = memref.load %arg1[%c140] : memref<151xf32, #tpu.memory_space<smem>>
    %c141 = arith.constant 141 : index
    %141 = memref.load %arg1[%c141] : memref<151xf32, #tpu.memory_space<smem>>
    %c142 = arith.constant 142 : index
    %142 = memref.load %arg1[%c142] : memref<151xf32, #tpu.memory_space<smem>>
    %c143 = arith.constant 143 : index
    %143 = memref.load %arg1[%c143] : memref<151xf32, #tpu.memory_space<smem>>
    %c144 = arith.constant 144 : index
    %144 = memref.load %arg1[%c144] : memref<151xf32, #tpu.memory_space<smem>>
    %c145 = arith.constant 145 : index
    %145 = memref.load %arg1[%c145] : memref<151xf32, #tpu.memory_space<smem>>
    %c146 = arith.constant 146 : index
    %146 = memref.load %arg1[%c146] : memref<151xf32, #tpu.memory_space<smem>>
    %c147 = arith.constant 147 : index
    %147 = memref.load %arg1[%c147] : memref<151xf32, #tpu.memory_space<smem>>
    %c148 = arith.constant 148 : index
    %148 = memref.load %arg1[%c148] : memref<151xf32, #tpu.memory_space<smem>>
    %c149 = arith.constant 149 : index
    %149 = memref.load %arg1[%c149] : memref<151xf32, #tpu.memory_space<smem>>
    %c150 = arith.constant 150 : index
    %150 = memref.load %arg1[%c150] : memref<151xf32, #tpu.memory_space<smem>>
    %c0_i32 = arith.constant 0 : i32
    %c2_i32 = arith.constant 2 : i32
    %151 = arith.addi %c0_i32, %c2_i32 : i32
    %c1_i32 = arith.constant 1 : i32
    scf.for %arg4 = %c0_i32 to %151 step %c1_i32  : i32 {
      %c1_i32_1 = arith.constant 1 : i32
      %152 = arith.muli %arg4, %c1_i32_1 : i32
      %c0_i32_2 = arith.constant 0 : i32
      %153 = arith.addi %c0_i32_2, %152 : i32
      %c16_i32 = arith.constant 16 : i32
      %154 = arith.muli %153, %c16_i32 : i32
      %155 = tpu.assume_multiple %154, 16 : i32
      %c0_3 = arith.constant 0 : index
      %156 = arith.index_cast %155 : i32 to index
      %c0_4 = arith.constant 0 : index
      %157 = vector.load %arg2[%c0_3, %156, %c0_4] : memref<2x32x128xf32, #tpu.memory_space<vmem>>, vector<1x16x128xf32>
      %158 = vector.shape_cast %157 : vector<1x16x128xf32> to vector<16x128xf32>
      %c1_5 = arith.constant 1 : index
      %159 = arith.index_cast %155 : i32 to index
      %c0_6 = arith.constant 0 : index
      %160 = vector.load %arg2[%c1_5, %159, %c0_6] : memref<2x32x128xf32, #tpu.memory_space<vmem>>, vector<1x16x128xf32>
      %161 = vector.shape_cast %160 : vector<1x16x128xf32> to vector<16x128xf32>
      %162 = vector.broadcast %0 : f32 to vector<16x128xf32>
      %163 = arith.mulf %158, %162 : vector<16x128xf32>
      %164 = vector.broadcast %1 : f32 to vector<16x128xf32>
      %165 = arith.mulf %161, %164 : vector<16x128xf32>
      %166 = arith.addf %163, %165 : vector<16x128xf32>
      %167 = vector.broadcast %20 : f32 to vector<16x128xf32>
      %168 = arith.addf %166, %167 : vector<16x128xf32>
      %cst = arith.constant 0.000000e+00 : f32
      %169 = vector.broadcast %cst : f32 to vector<16x128xf32>
      %170 = arith.maximumf %168, %169 : vector<16x128xf32>
      %171 = vector.broadcast %2 : f32 to vector<16x128xf32>
      %172 = arith.mulf %158, %171 : vector<16x128xf32>
      %173 = vector.broadcast %3 : f32 to vector<16x128xf32>
      %174 = arith.mulf %161, %173 : vector<16x128xf32>
      %175 = arith.addf %172, %174 : vector<16x128xf32>
      %176 = vector.broadcast %21 : f32 to vector<16x128xf32>
      %177 = arith.addf %175, %176 : vector<16x128xf32>
      %cst_7 = arith.constant 0.000000e+00 : f32
      %178 = vector.broadcast %cst_7 : f32 to vector<16x128xf32>
      %179 = arith.maximumf %177, %178 : vector<16x128xf32>
      %180 = vector.broadcast %4 : f32 to vector<16x128xf32>
      %181 = arith.mulf %158, %180 : vector<16x128xf32>
      %182 = vector.broadcast %5 : f32 to vector<16x128xf32>
      %183 = arith.mulf %161, %182 : vector<16x128xf32>
      %184 = arith.addf %181, %183 : vector<16x128xf32>
      %185 = vector.broadcast %22 : f32 to vector<16x128xf32>
      %186 = arith.addf %184, %185 : vector<16x128xf32>
      %cst_8 = arith.constant 0.000000e+00 : f32
      %187 = vector.broadcast %cst_8 : f32 to vector<16x128xf32>
      %188 = arith.maximumf %186, %187 : vector<16x128xf32>
      %189 = vector.broadcast %6 : f32 to vector<16x128xf32>
      %190 = arith.mulf %158, %189 : vector<16x128xf32>
      %191 = vector.broadcast %7 : f32 to vector<16x128xf32>
      %192 = arith.mulf %161, %191 : vector<16x128xf32>
      %193 = arith.addf %190, %192 : vector<16x128xf32>
      %194 = vector.broadcast %23 : f32 to vector<16x128xf32>
      %195 = arith.addf %193, %194 : vector<16x128xf32>
      %cst_9 = arith.constant 0.000000e+00 : f32
      %196 = vector.broadcast %cst_9 : f32 to vector<16x128xf32>
      %197 = arith.maximumf %195, %196 : vector<16x128xf32>
      %198 = vector.broadcast %8 : f32 to vector<16x128xf32>
      %199 = arith.mulf %158, %198 : vector<16x128xf32>
      %200 = vector.broadcast %9 : f32 to vector<16x128xf32>
      %201 = arith.mulf %161, %200 : vector<16x128xf32>
      %202 = arith.addf %199, %201 : vector<16x128xf32>
      %203 = vector.broadcast %24 : f32 to vector<16x128xf32>
      %204 = arith.addf %202, %203 : vector<16x128xf32>
      %cst_10 = arith.constant 0.000000e+00 : f32
      %205 = vector.broadcast %cst_10 : f32 to vector<16x128xf32>
      %206 = arith.maximumf %204, %205 : vector<16x128xf32>
      %207 = vector.broadcast %10 : f32 to vector<16x128xf32>
      %208 = arith.mulf %158, %207 : vector<16x128xf32>
      %209 = vector.broadcast %11 : f32 to vector<16x128xf32>
      %210 = arith.mulf %161, %209 : vector<16x128xf32>
      %211 = arith.addf %208, %210 : vector<16x128xf32>
      %212 = vector.broadcast %25 : f32 to vector<16x128xf32>
      %213 = arith.addf %211, %212 : vector<16x128xf32>
      %cst_11 = arith.constant 0.000000e+00 : f32
      %214 = vector.broadcast %cst_11 : f32 to vector<16x128xf32>
      %215 = arith.maximumf %213, %214 : vector<16x128xf32>
      %216 = vector.broadcast %12 : f32 to vector<16x128xf32>
      %217 = arith.mulf %158, %216 : vector<16x128xf32>
      %218 = vector.broadcast %13 : f32 to vector<16x128xf32>
      %219 = arith.mulf %161, %218 : vector<16x128xf32>
      %220 = arith.addf %217, %219 : vector<16x128xf32>
      %221 = vector.broadcast %26 : f32 to vector<16x128xf32>
      %222 = arith.addf %220, %221 : vector<16x128xf32>
      %cst_12 = arith.constant 0.000000e+00 : f32
      %223 = vector.broadcast %cst_12 : f32 to vector<16x128xf32>
      %224 = arith.maximumf %222, %223 : vector<16x128xf32>
      %225 = vector.broadcast %14 : f32 to vector<16x128xf32>
      %226 = arith.mulf %158, %225 : vector<16x128xf32>
      %227 = vector.broadcast %15 : f32 to vector<16x128xf32>
      %228 = arith.mulf %161, %227 : vector<16x128xf32>
      %229 = arith.addf %226, %228 : vector<16x128xf32>
      %230 = vector.broadcast %27 : f32 to vector<16x128xf32>
      %231 = arith.addf %229, %230 : vector<16x128xf32>
      %cst_13 = arith.constant 0.000000e+00 : f32
      %232 = vector.broadcast %cst_13 : f32 to vector<16x128xf32>
      %233 = arith.maximumf %231, %232 : vector<16x128xf32>
      %234 = vector.broadcast %16 : f32 to vector<16x128xf32>
      %235 = arith.mulf %158, %234 : vector<16x128xf32>
      %236 = vector.broadcast %17 : f32 to vector<16x128xf32>
      %237 = arith.mulf %161, %236 : vector<16x128xf32>
      %238 = arith.addf %235, %237 : vector<16x128xf32>
      %239 = vector.broadcast %28 : f32 to vector<16x128xf32>
      %240 = arith.addf %238, %239 : vector<16x128xf32>
      %cst_14 = arith.constant 0.000000e+00 : f32
      %241 = vector.broadcast %cst_14 : f32 to vector<16x128xf32>
      %242 = arith.maximumf %240, %241 : vector<16x128xf32>
      %243 = vector.broadcast %18 : f32 to vector<16x128xf32>
      %244 = arith.mulf %158, %243 : vector<16x128xf32>
      %245 = vector.broadcast %19 : f32 to vector<16x128xf32>
      %246 = arith.mulf %161, %245 : vector<16x128xf32>
      %247 = arith.addf %244, %246 : vector<16x128xf32>
      %248 = vector.broadcast %29 : f32 to vector<16x128xf32>
      %249 = arith.addf %247, %248 : vector<16x128xf32>
      %cst_15 = arith.constant 0.000000e+00 : f32
      %250 = vector.broadcast %cst_15 : f32 to vector<16x128xf32>
      %251 = arith.maximumf %249, %250 : vector<16x128xf32>
      %cst_16 = arith.constant 0.000000e+00 : f32
      %252 = vector.broadcast %cst_16 : f32 to vector<16x128xf32>
      %253 = vector.broadcast %150 : f32 to vector<16x128xf32>
      %254 = arith.addf %252, %253 : vector<16x128xf32>
      %cst_17 = arith.constant 0.000000e+00 : f32
      %255 = vector.broadcast %cst_17 : f32 to vector<16x128xf32>
      %256 = vector.broadcast %30 : f32 to vector<16x128xf32>
      %257 = arith.mulf %170, %256 : vector<16x128xf32>
      %258 = vector.broadcast %31 : f32 to vector<16x128xf32>
      %259 = arith.mulf %179, %258 : vector<16x128xf32>
      %260 = arith.addf %257, %259 : vector<16x128xf32>
      %261 = vector.broadcast %32 : f32 to vector<16x128xf32>
      %262 = arith.mulf %188, %261 : vector<16x128xf32>
      %263 = vector.broadcast %33 : f32 to vector<16x128xf32>
      %264 = arith.mulf %197, %263 : vector<16x128xf32>
      %265 = arith.addf %262, %264 : vector<16x128xf32>
      %266 = arith.addf %260, %265 : vector<16x128xf32>
      %267 = vector.broadcast %34 : f32 to vector<16x128xf32>
      %268 = arith.mulf %206, %267 : vector<16x128xf32>
      %269 = arith.addf %266, %268 : vector<16x128xf32>
      %270 = vector.broadcast %35 : f32 to vector<16x128xf32>
      %271 = arith.mulf %215, %270 : vector<16x128xf32>
      %272 = vector.broadcast %36 : f32 to vector<16x128xf32>
      %273 = arith.mulf %224, %272 : vector<16x128xf32>
      %274 = arith.addf %271, %273 : vector<16x128xf32>
      %275 = vector.broadcast %37 : f32 to vector<16x128xf32>
      %276 = arith.mulf %233, %275 : vector<16x128xf32>
      %277 = vector.broadcast %38 : f32 to vector<16x128xf32>
      %278 = arith.mulf %242, %277 : vector<16x128xf32>
      %279 = arith.addf %276, %278 : vector<16x128xf32>
      %280 = arith.addf %274, %279 : vector<16x128xf32>
      %281 = vector.broadcast %39 : f32 to vector<16x128xf32>
      %282 = arith.mulf %251, %281 : vector<16x128xf32>
      %283 = arith.addf %280, %282 : vector<16x128xf32>
      %284 = arith.addf %269, %283 : vector<16x128xf32>
      %285 = vector.broadcast %130 : f32 to vector<16x128xf32>
      %286 = arith.addf %284, %285 : vector<16x128xf32>
      %cst_18 = arith.constant 0.000000e+00 : f32
      %287 = vector.broadcast %cst_18 : f32 to vector<16x128xf32>
      %288 = arith.maximumf %286, %287 : vector<16x128xf32>
      %289 = vector.broadcast %140 : f32 to vector<16x128xf32>
      %290 = arith.mulf %288, %289 : vector<16x128xf32>
      %291 = arith.addf %254, %290 : vector<16x128xf32>
      %292 = vector.broadcast %40 : f32 to vector<16x128xf32>
      %293 = arith.mulf %170, %292 : vector<16x128xf32>
      %294 = vector.broadcast %41 : f32 to vector<16x128xf32>
      %295 = arith.mulf %179, %294 : vector<16x128xf32>
      %296 = arith.addf %293, %295 : vector<16x128xf32>
      %297 = vector.broadcast %42 : f32 to vector<16x128xf32>
      %298 = arith.mulf %188, %297 : vector<16x128xf32>
      %299 = vector.broadcast %43 : f32 to vector<16x128xf32>
      %300 = arith.mulf %197, %299 : vector<16x128xf32>
      %301 = arith.addf %298, %300 : vector<16x128xf32>
      %302 = arith.addf %296, %301 : vector<16x128xf32>
      %303 = vector.broadcast %44 : f32 to vector<16x128xf32>
      %304 = arith.mulf %206, %303 : vector<16x128xf32>
      %305 = arith.addf %302, %304 : vector<16x128xf32>
      %306 = vector.broadcast %45 : f32 to vector<16x128xf32>
      %307 = arith.mulf %215, %306 : vector<16x128xf32>
      %308 = vector.broadcast %46 : f32 to vector<16x128xf32>
      %309 = arith.mulf %224, %308 : vector<16x128xf32>
      %310 = arith.addf %307, %309 : vector<16x128xf32>
      %311 = vector.broadcast %47 : f32 to vector<16x128xf32>
      %312 = arith.mulf %233, %311 : vector<16x128xf32>
      %313 = vector.broadcast %48 : f32 to vector<16x128xf32>
      %314 = arith.mulf %242, %313 : vector<16x128xf32>
      %315 = arith.addf %312, %314 : vector<16x128xf32>
      %316 = arith.addf %310, %315 : vector<16x128xf32>
      %317 = vector.broadcast %49 : f32 to vector<16x128xf32>
      %318 = arith.mulf %251, %317 : vector<16x128xf32>
      %319 = arith.addf %316, %318 : vector<16x128xf32>
      %320 = arith.addf %305, %319 : vector<16x128xf32>
      %321 = vector.broadcast %131 : f32 to vector<16x128xf32>
      %322 = arith.addf %320, %321 : vector<16x128xf32>
      %cst_19 = arith.constant 0.000000e+00 : f32
      %323 = vector.broadcast %cst_19 : f32 to vector<16x128xf32>
      %324 = arith.maximumf %322, %323 : vector<16x128xf32>
      %325 = vector.broadcast %141 : f32 to vector<16x128xf32>
      %326 = arith.mulf %324, %325 : vector<16x128xf32>
      %327 = arith.addf %255, %326 : vector<16x128xf32>
      %328 = vector.broadcast %50 : f32 to vector<16x128xf32>
      %329 = arith.mulf %170, %328 : vector<16x128xf32>
      %330 = vector.broadcast %51 : f32 to vector<16x128xf32>
      %331 = arith.mulf %179, %330 : vector<16x128xf32>
      %332 = arith.addf %329, %331 : vector<16x128xf32>
      %333 = vector.broadcast %52 : f32 to vector<16x128xf32>
      %334 = arith.mulf %188, %333 : vector<16x128xf32>
      %335 = vector.broadcast %53 : f32 to vector<16x128xf32>
      %336 = arith.mulf %197, %335 : vector<16x128xf32>
      %337 = arith.addf %334, %336 : vector<16x128xf32>
      %338 = arith.addf %332, %337 : vector<16x128xf32>
      %339 = vector.broadcast %54 : f32 to vector<16x128xf32>
      %340 = arith.mulf %206, %339 : vector<16x128xf32>
      %341 = arith.addf %338, %340 : vector<16x128xf32>
      %342 = vector.broadcast %55 : f32 to vector<16x128xf32>
      %343 = arith.mulf %215, %342 : vector<16x128xf32>
      %344 = vector.broadcast %56 : f32 to vector<16x128xf32>
      %345 = arith.mulf %224, %344 : vector<16x128xf32>
      %346 = arith.addf %343, %345 : vector<16x128xf32>
      %347 = vector.broadcast %57 : f32 to vector<16x128xf32>
      %348 = arith.mulf %233, %347 : vector<16x128xf32>
      %349 = vector.broadcast %58 : f32 to vector<16x128xf32>
      %350 = arith.mulf %242, %349 : vector<16x128xf32>
      %351 = arith.addf %348, %350 : vector<16x128xf32>
      %352 = arith.addf %346, %351 : vector<16x128xf32>
      %353 = vector.broadcast %59 : f32 to vector<16x128xf32>
      %354 = arith.mulf %251, %353 : vector<16x128xf32>
      %355 = arith.addf %352, %354 : vector<16x128xf32>
      %356 = arith.addf %341, %355 : vector<16x128xf32>
      %357 = vector.broadcast %132 : f32 to vector<16x128xf32>
      %358 = arith.addf %356, %357 : vector<16x128xf32>
      %cst_20 = arith.constant 0.000000e+00 : f32
      %359 = vector.broadcast %cst_20 : f32 to vector<16x128xf32>
      %360 = arith.maximumf %358, %359 : vector<16x128xf32>
      %361 = vector.broadcast %142 : f32 to vector<16x128xf32>
      %362 = arith.mulf %360, %361 : vector<16x128xf32>
      %363 = arith.addf %291, %362 : vector<16x128xf32>
      %364 = vector.broadcast %60 : f32 to vector<16x128xf32>
      %365 = arith.mulf %170, %364 : vector<16x128xf32>
      %366 = vector.broadcast %61 : f32 to vector<16x128xf32>
      %367 = arith.mulf %179, %366 : vector<16x128xf32>
      %368 = arith.addf %365, %367 : vector<16x128xf32>
      %369 = vector.broadcast %62 : f32 to vector<16x128xf32>
      %370 = arith.mulf %188, %369 : vector<16x128xf32>
      %371 = vector.broadcast %63 : f32 to vector<16x128xf32>
      %372 = arith.mulf %197, %371 : vector<16x128xf32>
      %373 = arith.addf %370, %372 : vector<16x128xf32>
      %374 = arith.addf %368, %373 : vector<16x128xf32>
      %375 = vector.broadcast %64 : f32 to vector<16x128xf32>
      %376 = arith.mulf %206, %375 : vector<16x128xf32>
      %377 = arith.addf %374, %376 : vector<16x128xf32>
      %378 = vector.broadcast %65 : f32 to vector<16x128xf32>
      %379 = arith.mulf %215, %378 : vector<16x128xf32>
      %380 = vector.broadcast %66 : f32 to vector<16x128xf32>
      %381 = arith.mulf %224, %380 : vector<16x128xf32>
      %382 = arith.addf %379, %381 : vector<16x128xf32>
      %383 = vector.broadcast %67 : f32 to vector<16x128xf32>
      %384 = arith.mulf %233, %383 : vector<16x128xf32>
      %385 = vector.broadcast %68 : f32 to vector<16x128xf32>
      %386 = arith.mulf %242, %385 : vector<16x128xf32>
      %387 = arith.addf %384, %386 : vector<16x128xf32>
      %388 = arith.addf %382, %387 : vector<16x128xf32>
      %389 = vector.broadcast %69 : f32 to vector<16x128xf32>
      %390 = arith.mulf %251, %389 : vector<16x128xf32>
      %391 = arith.addf %388, %390 : vector<16x128xf32>
      %392 = arith.addf %377, %391 : vector<16x128xf32>
      %393 = vector.broadcast %133 : f32 to vector<16x128xf32>
      %394 = arith.addf %392, %393 : vector<16x128xf32>
      %cst_21 = arith.constant 0.000000e+00 : f32
      %395 = vector.broadcast %cst_21 : f32 to vector<16x128xf32>
      %396 = arith.maximumf %394, %395 : vector<16x128xf32>
      %397 = vector.broadcast %143 : f32 to vector<16x128xf32>
      %398 = arith.mulf %396, %397 : vector<16x128xf32>
      %399 = arith.addf %327, %398 : vector<16x128xf32>
      %400 = vector.broadcast %70 : f32 to vector<16x128xf32>
      %401 = arith.mulf %170, %400 : vector<16x128xf32>
      %402 = vector.broadcast %71 : f32 to vector<16x128xf32>
      %403 = arith.mulf %179, %402 : vector<16x128xf32>
      %404 = arith.addf %401, %403 : vector<16x128xf32>
      %405 = vector.broadcast %72 : f32 to vector<16x128xf32>
      %406 = arith.mulf %188, %405 : vector<16x128xf32>
      %407 = vector.broadcast %73 : f32 to vector<16x128xf32>
      %408 = arith.mulf %197, %407 : vector<16x128xf32>
      %409 = arith.addf %406, %408 : vector<16x128xf32>
      %410 = arith.addf %404, %409 : vector<16x128xf32>
      %411 = vector.broadcast %74 : f32 to vector<16x128xf32>
      %412 = arith.mulf %206, %411 : vector<16x128xf32>
      %413 = arith.addf %410, %412 : vector<16x128xf32>
      %414 = vector.broadcast %75 : f32 to vector<16x128xf32>
      %415 = arith.mulf %215, %414 : vector<16x128xf32>
      %416 = vector.broadcast %76 : f32 to vector<16x128xf32>
      %417 = arith.mulf %224, %416 : vector<16x128xf32>
      %418 = arith.addf %415, %417 : vector<16x128xf32>
      %419 = vector.broadcast %77 : f32 to vector<16x128xf32>
      %420 = arith.mulf %233, %419 : vector<16x128xf32>
      %421 = vector.broadcast %78 : f32 to vector<16x128xf32>
      %422 = arith.mulf %242, %421 : vector<16x128xf32>
      %423 = arith.addf %420, %422 : vector<16x128xf32>
      %424 = arith.addf %418, %423 : vector<16x128xf32>
      %425 = vector.broadcast %79 : f32 to vector<16x128xf32>
      %426 = arith.mulf %251, %425 : vector<16x128xf32>
      %427 = arith.addf %424, %426 : vector<16x128xf32>
      %428 = arith.addf %413, %427 : vector<16x128xf32>
      %429 = vector.broadcast %134 : f32 to vector<16x128xf32>
      %430 = arith.addf %428, %429 : vector<16x128xf32>
      %cst_22 = arith.constant 0.000000e+00 : f32
      %431 = vector.broadcast %cst_22 : f32 to vector<16x128xf32>
      %432 = arith.maximumf %430, %431 : vector<16x128xf32>
      %433 = vector.broadcast %144 : f32 to vector<16x128xf32>
      %434 = arith.mulf %432, %433 : vector<16x128xf32>
      %435 = arith.addf %363, %434 : vector<16x128xf32>
      %436 = vector.broadcast %80 : f32 to vector<16x128xf32>
      %437 = arith.mulf %170, %436 : vector<16x128xf32>
      %438 = vector.broadcast %81 : f32 to vector<16x128xf32>
      %439 = arith.mulf %179, %438 : vector<16x128xf32>
      %440 = arith.addf %437, %439 : vector<16x128xf32>
      %441 = vector.broadcast %82 : f32 to vector<16x128xf32>
      %442 = arith.mulf %188, %441 : vector<16x128xf32>
      %443 = vector.broadcast %83 : f32 to vector<16x128xf32>
      %444 = arith.mulf %197, %443 : vector<16x128xf32>
      %445 = arith.addf %442, %444 : vector<16x128xf32>
      %446 = arith.addf %440, %445 : vector<16x128xf32>
      %447 = vector.broadcast %84 : f32 to vector<16x128xf32>
      %448 = arith.mulf %206, %447 : vector<16x128xf32>
      %449 = arith.addf %446, %448 : vector<16x128xf32>
      %450 = vector.broadcast %85 : f32 to vector<16x128xf32>
      %451 = arith.mulf %215, %450 : vector<16x128xf32>
      %452 = vector.broadcast %86 : f32 to vector<16x128xf32>
      %453 = arith.mulf %224, %452 : vector<16x128xf32>
      %454 = arith.addf %451, %453 : vector<16x128xf32>
      %455 = vector.broadcast %87 : f32 to vector<16x128xf32>
      %456 = arith.mulf %233, %455 : vector<16x128xf32>
      %457 = vector.broadcast %88 : f32 to vector<16x128xf32>
      %458 = arith.mulf %242, %457 : vector<16x128xf32>
      %459 = arith.addf %456, %458 : vector<16x128xf32>
      %460 = arith.addf %454, %459 : vector<16x128xf32>
      %461 = vector.broadcast %89 : f32 to vector<16x128xf32>
      %462 = arith.mulf %251, %461 : vector<16x128xf32>
      %463 = arith.addf %460, %462 : vector<16x128xf32>
      %464 = arith.addf %449, %463 : vector<16x128xf32>
      %465 = vector.broadcast %135 : f32 to vector<16x128xf32>
      %466 = arith.addf %464, %465 : vector<16x128xf32>
      %cst_23 = arith.constant 0.000000e+00 : f32
      %467 = vector.broadcast %cst_23 : f32 to vector<16x128xf32>
      %468 = arith.maximumf %466, %467 : vector<16x128xf32>
      %469 = vector.broadcast %145 : f32 to vector<16x128xf32>
      %470 = arith.mulf %468, %469 : vector<16x128xf32>
      %471 = arith.addf %399, %470 : vector<16x128xf32>
      %472 = vector.broadcast %90 : f32 to vector<16x128xf32>
      %473 = arith.mulf %170, %472 : vector<16x128xf32>
      %474 = vector.broadcast %91 : f32 to vector<16x128xf32>
      %475 = arith.mulf %179, %474 : vector<16x128xf32>
      %476 = arith.addf %473, %475 : vector<16x128xf32>
      %477 = vector.broadcast %92 : f32 to vector<16x128xf32>
      %478 = arith.mulf %188, %477 : vector<16x128xf32>
      %479 = vector.broadcast %93 : f32 to vector<16x128xf32>
      %480 = arith.mulf %197, %479 : vector<16x128xf32>
      %481 = arith.addf %478, %480 : vector<16x128xf32>
      %482 = arith.addf %476, %481 : vector<16x128xf32>
      %483 = vector.broadcast %94 : f32 to vector<16x128xf32>
      %484 = arith.mulf %206, %483 : vector<16x128xf32>
      %485 = arith.addf %482, %484 : vector<16x128xf32>
      %486 = vector.broadcast %95 : f32 to vector<16x128xf32>
      %487 = arith.mulf %215, %486 : vector<16x128xf32>
      %488 = vector.broadcast %96 : f32 to vector<16x128xf32>
      %489 = arith.mulf %224, %488 : vector<16x128xf32>
      %490 = arith.addf %487, %489 : vector<16x128xf32>
      %491 = vector.broadcast %97 : f32 to vector<16x128xf32>
      %492 = arith.mulf %233, %491 : vector<16x128xf32>
      %493 = vector.broadcast %98 : f32 to vector<16x128xf32>
      %494 = arith.mulf %242, %493 : vector<16x128xf32>
      %495 = arith.addf %492, %494 : vector<16x128xf32>
      %496 = arith.addf %490, %495 : vector<16x128xf32>
      %497 = vector.broadcast %99 : f32 to vector<16x128xf32>
      %498 = arith.mulf %251, %497 : vector<16x128xf32>
      %499 = arith.addf %496, %498 : vector<16x128xf32>
      %500 = arith.addf %485, %499 : vector<16x128xf32>
      %501 = vector.broadcast %136 : f32 to vector<16x128xf32>
      %502 = arith.addf %500, %501 : vector<16x128xf32>
      %cst_24 = arith.constant 0.000000e+00 : f32
      %503 = vector.broadcast %cst_24 : f32 to vector<16x128xf32>
      %504 = arith.maximumf %502, %503 : vector<16x128xf32>
      %505 = vector.broadcast %146 : f32 to vector<16x128xf32>
      %506 = arith.mulf %504, %505 : vector<16x128xf32>
      %507 = arith.addf %435, %506 : vector<16x128xf32>
      %508 = vector.broadcast %100 : f32 to vector<16x128xf32>
      %509 = arith.mulf %170, %508 : vector<16x128xf32>
      %510 = vector.broadcast %101 : f32 to vector<16x128xf32>
      %511 = arith.mulf %179, %510 : vector<16x128xf32>
      %512 = arith.addf %509, %511 : vector<16x128xf32>
      %513 = vector.broadcast %102 : f32 to vector<16x128xf32>
      %514 = arith.mulf %188, %513 : vector<16x128xf32>
      %515 = vector.broadcast %103 : f32 to vector<16x128xf32>
      %516 = arith.mulf %197, %515 : vector<16x128xf32>
      %517 = arith.addf %514, %516 : vector<16x128xf32>
      %518 = arith.addf %512, %517 : vector<16x128xf32>
      %519 = vector.broadcast %104 : f32 to vector<16x128xf32>
      %520 = arith.mulf %206, %519 : vector<16x128xf32>
      %521 = arith.addf %518, %520 : vector<16x128xf32>
      %522 = vector.broadcast %105 : f32 to vector<16x128xf32>
      %523 = arith.mulf %215, %522 : vector<16x128xf32>
      %524 = vector.broadcast %106 : f32 to vector<16x128xf32>
      %525 = arith.mulf %224, %524 : vector<16x128xf32>
      %526 = arith.addf %523, %525 : vector<16x128xf32>
      %527 = vector.broadcast %107 : f32 to vector<16x128xf32>
      %528 = arith.mulf %233, %527 : vector<16x128xf32>
      %529 = vector.broadcast %108 : f32 to vector<16x128xf32>
      %530 = arith.mulf %242, %529 : vector<16x128xf32>
      %531 = arith.addf %528, %530 : vector<16x128xf32>
      %532 = arith.addf %526, %531 : vector<16x128xf32>
      %533 = vector.broadcast %109 : f32 to vector<16x128xf32>
      %534 = arith.mulf %251, %533 : vector<16x128xf32>
      %535 = arith.addf %532, %534 : vector<16x128xf32>
      %536 = arith.addf %521, %535 : vector<16x128xf32>
      %537 = vector.broadcast %137 : f32 to vector<16x128xf32>
      %538 = arith.addf %536, %537 : vector<16x128xf32>
      %cst_25 = arith.constant 0.000000e+00 : f32
      %539 = vector.broadcast %cst_25 : f32 to vector<16x128xf32>
      %540 = arith.maximumf %538, %539 : vector<16x128xf32>
      %541 = vector.broadcast %147 : f32 to vector<16x128xf32>
      %542 = arith.mulf %540, %541 : vector<16x128xf32>
      %543 = arith.addf %471, %542 : vector<16x128xf32>
      %544 = vector.broadcast %110 : f32 to vector<16x128xf32>
      %545 = arith.mulf %170, %544 : vector<16x128xf32>
      %546 = vector.broadcast %111 : f32 to vector<16x128xf32>
      %547 = arith.mulf %179, %546 : vector<16x128xf32>
      %548 = arith.addf %545, %547 : vector<16x128xf32>
      %549 = vector.broadcast %112 : f32 to vector<16x128xf32>
      %550 = arith.mulf %188, %549 : vector<16x128xf32>
      %551 = vector.broadcast %113 : f32 to vector<16x128xf32>
      %552 = arith.mulf %197, %551 : vector<16x128xf32>
      %553 = arith.addf %550, %552 : vector<16x128xf32>
      %554 = arith.addf %548, %553 : vector<16x128xf32>
      %555 = vector.broadcast %114 : f32 to vector<16x128xf32>
      %556 = arith.mulf %206, %555 : vector<16x128xf32>
      %557 = arith.addf %554, %556 : vector<16x128xf32>
      %558 = vector.broadcast %115 : f32 to vector<16x128xf32>
      %559 = arith.mulf %215, %558 : vector<16x128xf32>
      %560 = vector.broadcast %116 : f32 to vector<16x128xf32>
      %561 = arith.mulf %224, %560 : vector<16x128xf32>
      %562 = arith.addf %559, %561 : vector<16x128xf32>
      %563 = vector.broadcast %117 : f32 to vector<16x128xf32>
      %564 = arith.mulf %233, %563 : vector<16x128xf32>
      %565 = vector.broadcast %118 : f32 to vector<16x128xf32>
      %566 = arith.mulf %242, %565 : vector<16x128xf32>
      %567 = arith.addf %564, %566 : vector<16x128xf32>
      %568 = arith.addf %562, %567 : vector<16x128xf32>
      %569 = vector.broadcast %119 : f32 to vector<16x128xf32>
      %570 = arith.mulf %251, %569 : vector<16x128xf32>
      %571 = arith.addf %568, %570 : vector<16x128xf32>
      %572 = arith.addf %557, %571 : vector<16x128xf32>
      %573 = vector.broadcast %138 : f32 to vector<16x128xf32>
      %574 = arith.addf %572, %573 : vector<16x128xf32>
      %cst_26 = arith.constant 0.000000e+00 : f32
      %575 = vector.broadcast %cst_26 : f32 to vector<16x128xf32>
      %576 = arith.maximumf %574, %575 : vector<16x128xf32>
      %577 = vector.broadcast %148 : f32 to vector<16x128xf32>
      %578 = arith.mulf %576, %577 : vector<16x128xf32>
      %579 = arith.addf %507, %578 : vector<16x128xf32>
      %580 = vector.broadcast %120 : f32 to vector<16x128xf32>
      %581 = arith.mulf %170, %580 : vector<16x128xf32>
      %582 = vector.broadcast %121 : f32 to vector<16x128xf32>
      %583 = arith.mulf %179, %582 : vector<16x128xf32>
      %584 = arith.addf %581, %583 : vector<16x128xf32>
      %585 = vector.broadcast %122 : f32 to vector<16x128xf32>
      %586 = arith.mulf %188, %585 : vector<16x128xf32>
      %587 = vector.broadcast %123 : f32 to vector<16x128xf32>
      %588 = arith.mulf %197, %587 : vector<16x128xf32>
      %589 = arith.addf %586, %588 : vector<16x128xf32>
      %590 = arith.addf %584, %589 : vector<16x128xf32>
      %591 = vector.broadcast %124 : f32 to vector<16x128xf32>
      %592 = arith.mulf %206, %591 : vector<16x128xf32>
      %593 = arith.addf %590, %592 : vector<16x128xf32>
      %594 = vector.broadcast %125 : f32 to vector<16x128xf32>
      %595 = arith.mulf %215, %594 : vector<16x128xf32>
      %596 = vector.broadcast %126 : f32 to vector<16x128xf32>
      %597 = arith.mulf %224, %596 : vector<16x128xf32>
      %598 = arith.addf %595, %597 : vector<16x128xf32>
      %599 = vector.broadcast %127 : f32 to vector<16x128xf32>
      %600 = arith.mulf %233, %599 : vector<16x128xf32>
      %601 = vector.broadcast %128 : f32 to vector<16x128xf32>
      %602 = arith.mulf %242, %601 : vector<16x128xf32>
      %603 = arith.addf %600, %602 : vector<16x128xf32>
      %604 = arith.addf %598, %603 : vector<16x128xf32>
      %605 = vector.broadcast %129 : f32 to vector<16x128xf32>
      %606 = arith.mulf %251, %605 : vector<16x128xf32>
      %607 = arith.addf %604, %606 : vector<16x128xf32>
      %608 = arith.addf %593, %607 : vector<16x128xf32>
      %609 = vector.broadcast %139 : f32 to vector<16x128xf32>
      %610 = arith.addf %608, %609 : vector<16x128xf32>
      %cst_27 = arith.constant 0.000000e+00 : f32
      %611 = vector.broadcast %cst_27 : f32 to vector<16x128xf32>
      %612 = arith.maximumf %610, %611 : vector<16x128xf32>
      %613 = vector.broadcast %149 : f32 to vector<16x128xf32>
      %614 = arith.mulf %612, %613 : vector<16x128xf32>
      %615 = arith.addf %543, %614 : vector<16x128xf32>
      %616 = arith.addf %579, %615 : vector<16x128xf32>
      %617 = math.tanh %616 : vector<16x128xf32>
      %cst_28 = arith.constant 5.000000e-01 : f32
      %618 = vector.broadcast %cst_28 : f32 to vector<16x128xf32>
      %619 = arith.mulf %618, %617 : vector<16x128xf32>
      %cst_29 = arith.constant 5.000000e-01 : f32
      %620 = vector.broadcast %cst_29 : f32 to vector<16x128xf32>
      %621 = arith.addf %619, %620 : vector<16x128xf32>
      %622 = arith.index_cast %155 : i32 to index
      %c0_30 = arith.constant 0 : index
      %623 = vector.load %arg3[%622, %c0_30] : memref<32x128xf32, #tpu.memory_space<vmem>>, vector<16x128xf32>
      tpu.vector_store %arg3[%622, %c0_30], %621 {strides = array<i32>} : memref<32x128xf32, #tpu.memory_space<vmem>>, vector<16x128xf32>,
    }
    %c2_i32_0 = arith.constant 2 : i32
    return
  }
  func.func @transform_0(%arg0: i32) -> i32 {
    %c0_i32 = arith.constant 0 : i32
    %c0_i32_0 = arith.constant 0 : i32
    return %c0_i32 : i32
  }
  func.func @transform_1(%arg0: i32) -> (i32, i32, i32) {
    %c0_i32 = arith.constant 0 : i32
    %c0_i32_0 = arith.constant 0 : i32
    %c0_i32_1 = arith.constant 0 : i32
    return %c0_i32, %arg0, %c0_i32_0 : i32, i32, i32
  }
  func.func @transform_2(%arg0: i32) -> (i32, i32) {
    %c0_i32 = arith.constant 0 : i32
    %c0_i32_0 = arith.constant 0 : i32
    return %arg0, %c0_i32 : i32, i32
  }
}

</mosaic_0001>

<llo_original>
// kernel: priority_classifier.1
$region0: #{priority_classifier.1}
  #allocation0 [shape = 'u32[]', space=smem, size = 0x4, offset = 0x4, fixed_abs, tag = 'smem constant byte address 0x4 - core index']
  #allocation1 [shape = 'u32[144,128]{1,0:T(1,128)}', space=vmem, size = 0x12000, scoped, tag = 'internal scratch']
  %s0 = inlined_call_operand.vmem [shape: f32[151], index: 0, kind: input, shape index: {}]
  %s1 = inlined_call_operand.vmem [shape: f32[2,64,128], index: 1, kind: input, shape index: {}]
  %s2 = inlined_call_operand.vmem [shape: f32[64,128], index: 2, kind: output, shape index: {}]
  %s3 = sld [smem:[#allocation0]]
  $region90: #{priority_classifier.1} parent=0
    _
  %s5 = ssub.s32 1, %s3
  %s6 = scalar_select 0, %s5, %s3
  $region1: #{priority_classifier.1} parent=0
    #allocation2 [shape = 'u8[1024]{0}', space=smem, size = 0x400, scoped, tag = 'input window, operand 0, single buffered']
    #allocation3 [shape = 's32[2]{0}', space=sflag, size = 0x8, scoped, tag = 'scoped memory for priority_classifier.1']
    #allocation4 [shape = 'u8[65536]{0}', space=vmem, size = 0x10000, scoped, tag = 'input window, operand 1']
    %7 = vsyncpa [#allocation3], 0
    loop: start=0, step=1, limit=4
    $region2: #{priority_classifier.1} parent=1 // loop_pre_header
      _
    $region3: #{priority_classifier.1} parent=1 // loop_header
      %s9 = sphi 0, %s13
      %p10 = scmp.ge.s32.totalorder %s9, 4
      %s17 = sphi 0, %s17
      %s19 = sphi 0, %s17
      %s20 = sphi 0, %s19
      %s34 = sphi 0, %s20
      %s40 = sphi 0, %s42
      %s43 = sphi 0, %s40
      %s44 = sphi 0, %s43
      %s60 = sphi 0, %s44
      %s66 = sphi 0, %s68
      %s69 = sphi 0, %s66
      %s70 = sphi 0, %s69
      %s86 = sphi 0, %s70
    $region4: #{priority_classifier.1} parent=1 // loop_header_branch
      %12 = sbr.rel (%p10) target = $region8
    $region5: #{priority_classifier.1} parent=1 // loop_body
      %s14 = ssub.s32 %s9, 1
      %s15 = ssub.s32 %s9, 2
      %s16 = sadd.s32 %s9, 1
      %s18 = sadd.s32 %s17, 1
      %p21 = scmp.eq.s32.totalorder %s9, 1
      %p22 = scmp.ne.s32.totalorder %s17, %s19
      %p23 = scmp.eq.s32.totalorder %s9, 0
      %p24 = por %p22, %p23
      %p25 = scmp.ne.s32.totalorder %s17, %s19
      %p26 = scmp.eq.s32.totalorder %s14, 1
      %p27 = por %p25, %p26
      %p28 = scmp.ne.s32.totalorder %s19, %s20
      %p29 = scmp.eq.s32.totalorder %s14, 0
      %p30 = por %p28, %p29
      %p31 = scmp.ne.s32.totalorder %s19, %s20
      %p32 = scmp.eq.s32.totalorder %s15, 1
      %p33 = por %p31, %p32
      %p35 = scmp.ne.s32.totalorder %s20, %s34
      %p36 = scmp.eq.s32.totalorder %s15, 0
      %p37 = por %p35, %p36
      %s38 = ssub.s32 %s9, %s16
      %p39 = scmp.eq.s32.totalorder %s38, 0
      %s41 = sadd.s32 %s40, 1
      %s42 = scalar_select %p39, %s40, %s41
      %p45 = pneg %p39
      %p46 = scmp.eq.s32.totalorder %s9, 1
      %p47 = por %p45, %p46
      %p48 = scmp.ne.s32.totalorder %s40, %s43
      %p49 = scmp.eq.s32.totalorder %s9, 0
      %p50 = por %p48, %p49
      %p51 = scmp.ne.s32.totalorder %s40, %s43
      %p52 = scmp.eq.s32.totalorder %s14, 1
      %p53 = por %p51, %p52
      %p54 = scmp.ne.s32.totalorder %s43, %s44
      %p55 = scmp.eq.s32.totalorder %s14, 0
      %p56 = por %p54, %p55
      %p57 = scmp.ne.s32.totalorder %s43, %s44
      %p58 = scmp.eq.s32.totalorder %s15, 1
      %p59 = por %p57, %p58
      %p61 = scmp.ne.s32.totalorder %s44, %s60
      %p62 = scmp.eq.s32.totalorder %s15, 0
      %p63 = por %p61, %p62
      %s64 = ssub.s32 %s9, %s16
      %p65 = scmp.eq.s32.totalorder %s64, 0
      %s67 = sadd.s32 %s66, 1
      %s68 = scalar_select %p65, %s66, %s67
      %p71 = pneg %p65
      %p72 = scmp.eq.s32.totalorder %s9, 1
      %p73 = por %p71, %p72
      %p74 = scmp.ne.s32.totalorder %s66, %s69
      %p75 = scmp.eq.s32.totalorder %s9, 0
      %p76 = por %p74, %p75
      %p77 = scmp.ne.s32.totalorder %s66, %s69
      %p78 = scmp.eq.s32.totalorder %s14, 1
      %p79 = por %p77, %p78
      %p80 = scmp.ne.s32.totalorder %s69, %s70
      %p81 = scmp.eq.s32.totalorder %s14, 0
      %p82 = por %p80, %p81
      %p83 = scmp.ne.s32.totalorder %s69, %s70
      %p84 = scmp.eq.s32.totalorder %s15, 1
      %p85 = por %p83, %p84
      %p87 = scmp.ne.s32.totalorder %s70, %s86
      %p88 = scmp.eq.s32.totalorder %s15, 0
      %p89 = por %p87, %p88
      %p90 = scmp.le.s32.totalorder 1, %s9
      %p91 = scmp.lt.s32.totalorder %s9, 3
      %p92 = pnand %p90, %p91
      %p93 = pneg %p92
      // Predicated region
      $region9: #{priority_classifier.1} parent=5 // pred_check
        _
      $region10: #{priority_classifier.1} parent=5 // pred_check_branch
        %95 = sbr.rel (%p92) target = $region12
      $region11: #{priority_classifier.1} parent=5 // pred_region
        %s96 = ssub.s32 %s9, 1
        // Predicated region
        $region13: #{priority_classifier.1} parent=11 // pred_check
          %p97 = pneg %p30
        $region14: #{priority_classifier.1} parent=11 // pred_check_branch
          %99 = sbr.rel (%p97) target = $region16
        $region15: #{priority_classifier.1} parent=11 // pred_region
          %s101 = ssub.s32 32, 32
          %102 = vsyncadd [#allocation3], %s101
          %s104 = sshll.u32 %s0, 4
          %s105 = int_to_ptr.vmem [resolvable:$true] %s104
          %107 = dma.vmem_to_smem %s105, 32, [#allocation2], [#allocation3]
        $region16: #{priority_classifier.1} parent=11 // pred_fallthru
          _
      $region12: #{priority_classifier.1} parent=5 // pred_fallthru
        _
      %p108 = scmp.lt.s32.totalorder %s9, 2
      // Predicated region
      $region17: #{priority_classifier.1} parent=5 // pred_check
        %p109 = pneg %p108
      $region18: #{priority_classifier.1} parent=5 // pred_check_branch
        %111 = sbr.rel (%p109) target = $region20
      $region19: #{priority_classifier.1} parent=5 // pred_region
        // Predicated region
        $region21: #{priority_classifier.1} parent=19 // pred_check
          %p112 = pneg %p50
        $region22: #{priority_classifier.1} parent=19 // pred_check_branch
          %114 = sbr.rel (%p112) target = $region24
        $region23: #{priority_classifier.1} parent=19 // pred_region
          %s115 = sand.u32 %s40, 1
          %s116 = sand.u32 %s40, 1
          %s117 = smul.addr %s116, 64
          %s118 = scalar_lea.vmem [#allocation4], %s117
          %s119 = smul.u32 4, %s9
          %s120 = smul.addr %s119, 8
          %s121 = scalar_lea.vmem %s1, %s120
          // Predicated region
          $region25: #{priority_classifier.1} parent=23 // pred_check
            _
          $region26: #{priority_classifier.1} parent=23 // pred_check_branch
            %123 = sbr.rel (0) target = $region28
          $region27: #{priority_classifier.1} parent=23 // pred_region
            // Predicated region
            $region29: #{priority_classifier.1} parent=27 // pred_check
              _
            $region30: #{priority_classifier.1} parent=27 // pred_check_branch
              %125 = sbr.rel (0) target = $region32
            $region31: #{priority_classifier.1} parent=27 // pred_region
              // Predicated region
              $region44: #{priority_classifier.1} parent=31 // pred_check
                _
              $region45: #{priority_classifier.1} parent=31 // pred_check_branch
                %154 = sbr.rel (0) target = $region47
              $region46: #{priority_classifier.1} parent=31 // pred_region
                loop: start=0, step=1, limit=1
                $region48: #{priority_classifier.1} parent=46 // loop_pre_header
                  _
                $region49: #{priority_classifier.1} parent=46 // loop_header
                  %s156 = sphi 0, %s160
                  %p157 = scmp.ge.s32.totalorder %s156, 1
                  %s161 = sphi %s121, %s121
                  %s162 = sphi %s118, %s118
                $region50: #{priority_classifier.1} parent=46 // loop_header_branch
                  %159 = sbr.rel (%p157) target = $region54
                $region51: #{priority_classifier.1} parent=46 // loop_body
                  %v163 = vld [vmem:[%s161] sm:$0xff]
                  %164 = vst [vmem:[%s162] sm:$0xff] %v163
                  %v165 = vld [vmem:[%s161 + $0x8] sm:$0xff]
                  %166 = vst [vmem:[%s162 + $0x8] sm:$0xff] %v165
                  %v167 = vld [vmem:[%s161 + $0x10] sm:$0xff]
                  %168 = vst [vmem:[%s162 + $0x10] sm:$0xff] %v167
                  %v169 = vld [vmem:[%s161 + $0x18] sm:$0xff]
                  %170 = vst [vmem:[%s162 + $0x18] sm:$0xff] %v169
                  %v171 = vld [vmem:[%s161 + $0x40] sm:$0xff]
                  %172 = vst [vmem:[%s162 + $0x20] sm:$0xff] %v171
                  %v173 = vld [vmem:[%s161 + $0x48] sm:$0xff]
                  %174 = vst [vmem:[%s162 + $0x28] sm:$0xff] %v173
                  %v175 = vld [vmem:[%s161 + $0x50] sm:$0xff]
                  %176 = vst [vmem:[%s162 + $0x30] sm:$0xff] %v175
                  %v177 = vld [vmem:[%s161 + $0x58] sm:$0xff]
                  %178 = vst [vmem:[%s162 + $0x38] sm:$0xff] %v177
                $region52: #{priority_classifier.1} parent=46 // loop_footer
                  %s160 = sadd.s32 1, %s156
                $region53: #{priority_classifier.1} parent=46 // loop_footer_branch
                  %155 = sbr.rel target = $region49
                $region54: #{priority_classifier.1} parent=46 // loop_exit
                  _
              $region47: #{priority_classifier.1} parent=31 // pred_fallthru
                _
              // Predicated region
              $region55: #{priority_classifier.1} parent=31 // pred_check
                _
              $region56: #{priority_classifier.1} parent=31 // pred_check_branch
                %180 = sbr.rel target = $region58
              $region57: #{priority_classifier.1} parent=31 // pred_region
                _
              $region58: #{priority_classifier.1} parent=31 // pred_fallthru
                _
            $region32: #{priority_classifier.1} parent=27 // pred_fallthru
              _
            // Predicated region
            $region33: #{priority_classifier.1} parent=27 // pred_check
              _
            $region34: #{priority_classifier.1} parent=27 // pred_check_branch
              %127 = sbr.rel target = $region36
            $region35: #{priority_classifier.1} parent=27 // pred_region
              loop: start=0, step=1, limit=1
              $region37: #{priority_classifier.1} parent=35 // loop_pre_header
                _
              $region38: #{priority_classifier.1} parent=35 // loop_header
                %s130 = sphi 0, %s134
                %p131 = scmp.ge.s32.totalorder %s130, 1
                %s135 = sphi %s121, %s121
                %s136 = sphi %s118, %s118
              $region39: #{priority_classifier.1} parent=35 // loop_header_branch
                %133 = sbr.rel (%p131) target = $region43
              $region40: #{priority_classifier.1} parent=35 // loop_body
                %v137 = vld [vmem:[%s135] sm:$0xff]
                %138 = vst [vmem:[%s136] sm:$0xff] %v137
                %v139 = vld [vmem:[%s135 + $0x8] sm:$0xff]
                %140 = vst [vmem:[%s136 + $0x8] sm:$0xff] %v139
                %v141 = vld [vmem:[%s135 + $0x10] sm:$0xff]
                %142 = vst [vmem:[%s136 + $0x10] sm:$0xff] %v141
                %v143 = vld [vmem:[%s135 + $0x18] sm:$0xff]
                %144 = vst [vmem:[%s136 + $0x18] sm:$0xff] %v143
                %v145 = vld [vmem:[%s135 + $0x40] sm:$0xff]
                %146 = vst [vmem:[%s136 + $0x20] sm:$0xff] %v145
                %v147 = vld [vmem:[%s135 + $0x48] sm:$0xff]
                %148 = vst [vmem:[%s136 + $0x28] sm:$0xff] %v147
                %v149 = vld [vmem:[%s135 + $0x50] sm:$0xff]
                %150 = vst [vmem:[%s136 + $0x30] sm:$0xff] %v149
                %v151 = vld [vmem:[%s135 + $0x58] sm:$0xff]
                %152 = vst [vmem:[%s136 + $0x38] sm:$0xff] %v151
              $region41: #{priority_classifier.1} parent=35 // loop_footer
                %s134 = sadd.s32 1, %s130
              $region42: #{priority_classifier.1} parent=35 // loop_footer_branch
                %129 = sbr.rel target = $region38
              $region43: #{priority_classifier.1} parent=35 // loop_exit
                _
            $region36: #{priority_classifier.1} parent=27 // pred_fallthru
              _
          $region28: #{priority_classifier.1} parent=23 // pred_fallthru
            _
          %181 = vnop
        $region24: #{priority_classifier.1} parent=19 // pred_fallthru
          _
      $region20: #{priority_classifier.1} parent=5 // pred_fallthru
        _
      %p182 = scmp.le.s32.totalorder 1, %s9
      %p183 = scmp.lt.s32.totalorder %s9, 3
      %p184 = pnand %p182, %p183
      %p185 = pneg %p184
      // Predicated region
      $region59: #{priority_classifier.1} parent=5 // pred_check
        _
      $region60: #{priority_classifier.1} parent=5 // pred_check_branch
        %187 = sbr.rel (%p184) target = $region62
      $region61: #{priority_classifier.1} parent=5 // pred_region
        %s188 = ssub.s32 %s9, 1
        // Predicated region
        $region63: #{priority_classifier.1} parent=61 // pred_check
          %p189 = pneg %p30
        $region64: #{priority_classifier.1} parent=61 // pred_check_branch
          %191 = sbr.rel (%p189) target = $region66
        $region65: #{priority_classifier.1} parent=61 // pred_region
          %192 = dma.done [#allocation3], 32
        $region66: #{priority_classifier.1} parent=61 // pred_fallthru
          _
        %s193 = sand.u32 %s43, 1
        %s194 = sand.u32 %s43, 1
        %s195 = smul.addr %s194, 64
        %s196 = scalar_lea.vmem [#allocation4], %s195
        // Predicated region
        $region67: #{priority_classifier.1} parent=61 // pred_check
          %p197 = pneg %p56
        $region68: #{priority_classifier.1} parent=61 // pred_check_branch
          %199 = sbr.rel (%p197) target = $region70
        $region69: #{priority_classifier.1} parent=61 // pred_region
          _
        $region70: #{priority_classifier.1} parent=61 // pred_fallthru
          _
        %200 = sfence
        %p201 = pneg %p30
        %p202 = pneg %p27
        %s203 = sand.u32 %s43, 1
        %s204 = sand.u32 %s43, 1
        %s205 = smul.addr %s204, 64
        %s206 = scalar_lea.vmem [#allocation4], %s205
        %p207 = pneg %p56
        %p208 = pneg %p53
        %p209 = pneg %p82
        %p210 = pneg %p79
        %s211 = smul.u32 4, %s14
        %p212 = scmp.lt.s32.totalorder %s211, 7
        %s213 = scalar_select %p212, %s211, 7
        %s214 = smul.addr %s213, 8
        %s215 = scalar_lea.vmem %s2, %s214
        %s216 = smul.u32 4, %s14
        %s217 = smul.u32 4, %s14
        %p218 = scmp.lt.s32.totalorder %s217, 7
        %s219 = scalar_select %p218, %s217, 7
        %s220 = smul.addr %s219, 8
        %s221 = scalar_lea.vmem %s2, %s220
        %s222 = smul.u32 4, %s14
        %s223 = sld [smem:[#allocation2]]
        %s224 = sld [smem:[#allocation2 + $0x1]]
        %s225 = sld [smem:[#allocation2 + $0x2]]
        %s226 = sld [smem:[#allocation2 + $0x3]]
        %s227 = sld [smem:[#allocation2 + $0x4]]
        %s228 = sld [smem:[#allocation2 + $0x5]]
        %s229 = sld [smem:[#allocation2 + $0x6]]
        %s230 = sld [smem:[#allocation2 + $0x7]]
        %s231 = sld [smem:[#allocation2 + $0x8]]
        %s232 = sld [smem:[#allocation2 + $0x9]]
        %s233 = sld [smem:[#allocation2 + $0xa]]
        %s234 = sld [smem:[#allocation2 + $0xb]]
        %s235 = sld [smem:[#allocation2 + $0xc]]
        %s236 = sld [smem:[#allocation2 + $0xd]]
        %s237 = sld [smem:[#allocation2 + $0xe]]
        %s238 = sld [smem:[#allocation2 + $0xf]]
        %s239 = sld [smem:[#allocation2 + $0x10]]
        %s240 = sld [smem:[#allocation2 + $0x11]]
        %s241 = sld [smem:[#allocation2 + $0x12]]
        %s242 = sld [smem:[#allocation2 + $0x13]]
        %s243 = sld [smem:[#allocation2 + $0x14]]
        %s244 = sld [smem:[#allocation2 + $0x15]]
        %s245 = sld [smem:[#allocation2 + $0x16]]
        %s246 = sld [smem:[#allocation2 + $0x17]]
        %s247 = sld [smem:[#allocation2 + $0x18]]
        %s248 = sld [smem:[#allocation2 + $0x19]]
        %s249 = sld [smem:[#allocation2 + $0x1a]]
        %s250 = sld [smem:[#allocation2 + $0x1b]]
        %s251 = sld [smem:[#allocation2 + $0x1c]]
        %s252 = sld [smem:[#allocation2 + $0x1d]]
        %s253 = sld [smem:[#allocation2 + $0x1e]]
        %s254 = sld [smem:[#allocation2 + $0x1f]]
        %s255 = sld [smem:[#allocation2 + $0x20]]
        %s256 = sld [smem:[#allocation2 + $0x21]]
        %s257 = sld [smem:[#allocation2 + $0x22]]
        %s258 = sld [smem:[#allocation2 + $0x23]]
        %s259 = sld [smem:[#allocation2 + $0x24]]
        %s260 = sld [smem:[#allocation2 + $0x25]]
        %s261 = sld [smem:[#allocation2 + $0x26]]
        %s262 = sld [smem:[#allocation2 + $0x27]]
        %s263 = sld [smem:[#allocation2 + $0x28]]
        %s264 = sld [smem:[#allocation2 + $0x29]]
        %s265 = sld [smem:[#allocation2 + $0x2a]]
        %s266 = sld [smem:[#allocation2 + $0x2b]]
        %s267 = sld [smem:[#allocation2 + $0x2c]]
        %s268 = sld [smem:[#allocation2 + $0x2d]]
        %s269 = sld [smem:[#allocation2 + $0x2e]]
        %s270 = sld [smem:[#allocation2 + $0x2f]]
        %s271 = sld [smem:[#allocation2 + $0x30]]
        %s272 = sld [smem:[#allocation2 + $0x31]]
        %s273 = sld [smem:[#allocation2 + $0x32]]
        %s274 = sld [smem:[#allocation2 + $0x33]]
        %s275 = sld [smem:[#allocation2 + $0x34]]
        %s276 = sld [smem:[#allocation2 + $0x35]]
        %s277 = sld [smem:[#allocation2 + $0x36]]
        %s278 = sld [smem:[#allocation2 + $0x37]]
        %s279 = sld [smem:[#allocation2 + $0x38]]
        %s280 = sld [smem:[#allocation2 + $0x39]]
        %s281 = sld [smem:[#allocation2 + $0x3a]]
        %s282 = sld [smem:[#allocation2 + $0x3b]]
        %s283 = sld [smem:[#allocation2 + $0x3c]]
        %s284 = sld [smem:[#allocation2 + $0x3d]]
        %s285 = sld [smem:[#allocation2 + $0x3e]]
        %s286 = sld [smem:[#allocation2 + $0x3f]]
        %s287 = sld [smem:[#allocation2 + $0x40]]
        %s288 = sld [smem:[#allocation2 + $0x41]]
        %s289 = sld [smem:[#allocation2 + $0x42]]
        %s290 = sld [smem:[#allocation2 + $0x43]]
        %s291 = sld [smem:[#allocation2 + $0x44]]
        %s292 = sld [smem:[#allocation2 + $0x45]]
        %s293 = sld [smem:[#allocation2 + $0x46]]
        %s294 = sld [smem:[#allocation2 + $0x47]]
        %s295 = sld [smem:[#allocation2 + $0x48]]
        %s296 = sld [smem:[#allocation2 + $0x49]]
        %s297 = sld [smem:[#allocation2 + $0x4a]]
        %s298 = sld [smem:[#allocation2 + $0x4b]]
        %s299 = sld [smem:[#allocation2 + $0x4c]]
        %s300 = sld [smem:[#allocation2 + $0x4d]]
        %s301 = sld [smem:[#allocation2 + $0x4e]]
        %s302 = sld [smem:[#allocation2 + $0x4f]]
        %s303 = sld [smem:[#allocation2 + $0x50]]
        %s304 = sld [smem:[#allocation2 + $0x51]]
        %s305 = sld [smem:[#allocation2 + $0x52]]
        %s306 = sld [smem:[#allocation2 + $0x53]]
        %s307 = sld [smem:[#allocation2 + $0x54]]
        %s308 = sld [smem:[#allocation2 + $0x55]]
        %s309 = sld [smem:[#allocation2 + $0x56]]
        %s310 = sld [smem:[#allocation2 + $0x57]]
        %s311 = sld [smem:[#allocation2 + $0x58]]
        %s312 = sld [smem:[#allocation2 + $0x59]]
        %s313 = sld [smem:[#allocation2 + $0x5a]]
        %s314 = sld [smem:[#allocation2 + $0x5b]]
        %s315 = sld [smem:[#allocation2 + $0x5c]]
        %s316 = sld [smem:[#allocation2 + $0x5d]]
        %s317 = sld [smem:[#allocation2 + $0x5e]]
        %s318 = sld [smem:[#allocation2 + $0x5f]]
        %s319 = sld [smem:[#allocation2 + $0x60]]
        %s320 = sld [smem:[#allocation2 + $0x61]]
        %s321 = sld [smem:[#allocation2 + $0x62]]
        %s322 = sld [smem:[#allocation2 + $0x63]]
        %s323 = sld [smem:[#allocation2 + $0x64]]
        %s324 = sld [smem:[#allocation2 + $0x65]]
        %s325 = sld [smem:[#allocation2 + $0x66]]
        %s326 = sld [smem:[#allocation2 + $0x67]]
        %s327 = sld [smem:[#allocation2 + $0x68]]
        %s328 = sld [smem:[#allocation2 + $0x69]]
        %s329 = sld [smem:[#allocation2 + $0x6a]]
        %s330 = sld [smem:[#allocation2 + $0x6b]]
        %s331 = sld [smem:[#allocation2 + $0x6c]]
        %s332 = sld [smem:[#allocation2 + $0x6d]]
        %s333 = sld [smem:[#allocation2 + $0x6e]]
        %s334 = sld [smem:[#allocation2 + $0x6f]]
        %s335 = sld [smem:[#allocation2 + $0x70]]
        %s336 = sld [smem:[#allocation2 + $0x71]]
        %s337 = sld [smem:[#allocation2 + $0x72]]
        %s338 = sld [smem:[#allocation2 + $0x73]]
        %s339 = sld [smem:[#allocation2 + $0x74]]
        %s340 = sld [smem:[#allocation2 + $0x75]]
        %s341 = sld [smem:[#allocation2 + $0x76]]
        %s342 = sld [smem:[#allocation2 + $0x77]]
        %s343 = sld [smem:[#allocation2 + $0x78]]
        %s344 = sld [smem:[#allocation2 + $0x79]]
        %s345 = sld [smem:[#allocation2 + $0x7a]]
        %s346 = sld [smem:[#allocation2 + $0x7b]]
        %s347 = sld [smem:[#allocation2 + $0x7c]]
        %s348 = sld [smem:[#allocation2 + $0x7d]]
        %s349 = sld [smem:[#allocation2 + $0x7e]]
        %s350 = sld [smem:[#allocation2 + $0x7f]]
        %s351 = sld [smem:[#allocation2 + $0x80]]
        %s352 = sld [smem:[#allocation2 + $0x81]]
        %s353 = sld [smem:[#allocation2 + $0x82]]
        %s354 = sld [smem:[#allocation2 + $0x83]]
        %s355 = sld [smem:[#allocation2 + $0x84]]
        %s356 = sld [smem:[#allocation2 + $0x85]]
        %s357 = sld [smem:[#allocation2 + $0x86]]
        %s358 = sld [smem:[#allocation2 + $0x87]]
        %s359 = sld [smem:[#allocation2 + $0x88]]
        %s360 = sld [smem:[#allocation2 + $0x89]]
        %s361 = sld [smem:[#allocation2 + $0x8a]]
        %s362 = sld [smem:[#allocation2 + $0x8b]]
        %s363 = sld [smem:[#allocation2 + $0x8c]]
        %s364 = sld [smem:[#allocation2 + $0x8d]]
        %s365 = sld [smem:[#allocation2 + $0x8e]]
        %s366 = sld [smem:[#allocation2 + $0x8f]]
        %s367 = sld [smem:[#allocation2 + $0x90]]
        %s368 = sld [smem:[#allocation2 + $0x91]]
        %s369 = sld [smem:[#allocation2 + $0x92]]
        %s370 = sld [smem:[#allocation2 + $0x93]]
        %s371 = sld [smem:[#allocation2 + $0x94]]
        %s372 = sld [smem:[#allocation2 + $0x95]]
        %s373 = sld [smem:[#allocation2 + $0x96]]
        loop: start=0, step=1, limit=2
        $region71: #{priority_classifier.1} parent=61 // loop_pre_header
          _
        $region72: #{priority_classifier.1} parent=61 // loop_header
          %s375 = sphi 0, %s379
          %p376 = scmp.ge.s32.totalorder %s375, 2
        $region73: #{priority_classifier.1} parent=61 // loop_header_branch
          %378 = sbr.rel (%p376) target = $region77
        $region74: #{priority_classifier.1} parent=61 // loop_body
          %s380 = smul.u32 %s375, 16
          %s381 = scalar_lea.vmem %s196, %s380 [#allocation4]
          %v382 = vld [vmem:[%s381] sm:$0xff]
          %v383 = vld [vmem:[%s381 + $0x8] sm:$0xff]
          %s384 = sadd.s32 %s380, 32
          %s385 = scalar_lea.vmem %s196, %s384 [#allocation4]
          %v386 = vld [vmem:[%s385] sm:$0xff]
          %v387 = vld [vmem:[%s385 + $0x8] sm:$0xff]
          %v388 = vstv %s223
          %v389 = vmul.f32 %v382, %v388
          %v390 = vmul.f32 %v383, %v388
          %v391 = vstv %s224
          %v392 = vmul.f32 %v386, %v391
          %v393 = vmul.f32 %v387, %v391
          %v394 = vadd.f32 %v389, %v392
          %v395 = vadd.f32 %v390, %v393
          %v396 = vstv %s243
          %v397 = vadd.f32 %v394, %v396
          %v398 = vadd.f32 %v395, %v396
          %v399 = vmax.f32 %v397, 0.0
          %v400 = vmax.f32 %v398, 0.0
          %v401 = vstv %s225
          %v402 = vmul.f32 %v382, %v401
          %v403 = vmul.f32 %v383, %v401
          %v404 = vstv %s226
          %v405 = vmul.f32 %v386, %v404
          %v406 = vmul.f32 %v387, %v404
          %v407 = vadd.f32 %v402, %v405
          %v408 = vadd.f32 %v403, %v406
          %v409 = vstv %s244
          %v410 = vadd.f32 %v407, %v409
          %v411 = vadd.f32 %v408, %v409
          %v412 = vmax.f32 %v410, 0.0
          %v413 = vmax.f32 %v411, 0.0
          %v414 = vstv %s227
          %v415 = vmul.f32 %v382, %v414
          %v416 = vmul.f32 %v383, %v414
          %v417 = vstv %s228
          %v418 = vmul.f32 %v386, %v417
          %v419 = vmul.f32 %v387, %v417
          %v420 = vadd.f32 %v415, %v418
          %v421 = vadd.f32 %v416, %v419
          %v422 = vstv %s245
          %v423 = vadd.f32 %v420, %v422
          %v424 = vadd.f32 %v421, %v422
          %v425 = vmax.f32 %v423, 0.0
          %v426 = vmax.f32 %v424, 0.0
          %v427 = vstv %s229
          %v428 = vmul.f32 %v382, %v427
          %v429 = vmul.f32 %v383, %v427
          %v430 = vstv %s230
          %v431 = vmul.f32 %v386, %v430
          %v432 = vmul.f32 %v387, %v430
          %v433 = vadd.f32 %v428, %v431
          %v434 = vadd.f32 %v429, %v432
          %v435 = vstv %s246
          %v436 = vadd.f32 %v433, %v435
          %v437 = vadd.f32 %v434, %v435
          %v438 = vmax.f32 %v436, 0.0
          %v439 = vmax.f32 %v437, 0.0
          %v440 = vstv %s231
          %v441 = vmul.f32 %v382, %v440
          %v442 = vmul.f32 %v383, %v440
          %v443 = vstv %s232
          %v444 = vmul.f32 %v386, %v443
          %v445 = vmul.f32 %v387, %v443
          %v446 = vadd.f32 %v441, %v444
          %v447 = vadd.f32 %v442, %v445
          %v448 = vstv %s247
          %v449 = vadd.f32 %v446, %v448
          %v450 = vadd.f32 %v447, %v448
          %v451 = vmax.f32 %v449, 0.0
          %v452 = vmax.f32 %v450, 0.0
          %v453 = vstv %s233
          %v454 = vmul.f32 %v382, %v453
          %v455 = vmul.f32 %v383, %v453
          %v456 = vstv %s234
          %v457 = vmul.f32 %v386, %v456
          %v458 = vmul.f32 %v387, %v456
          %v459 = vadd.f32 %v454, %v457
          %v460 = vadd.f32 %v455, %v458
          %v461 = vstv %s248
          %v462 = vadd.f32 %v459, %v461
          %v463 = vadd.f32 %v460, %v461
          %v464 = vmax.f32 %v462, 0.0
          %v465 = vmax.f32 %v463, 0.0
          %v466 = vstv %s235
          %v467 = vmul.f32 %v382, %v466
          %v468 = vmul.f32 %v383, %v466
          %v469 = vstv %s236
          %v470 = vmul.f32 %v386, %v469
          %v471 = vmul.f32 %v387, %v469
          %v472 = vadd.f32 %v467, %v470
          %v473 = vadd.f32 %v468, %v471
          %v474 = vstv %s249
          %v475 = vadd.f32 %v472, %v474
          %v476 = vadd.f32 %v473, %v474
          %v477 = vmax.f32 %v475, 0.0
          %v478 = vmax.f32 %v476, 0.0
          %v479 = vstv %s237
          %v480 = vmul.f32 %v382, %v479
          %v481 = vmul.f32 %v383, %v479
          %v482 = vstv %s238
          %v483 = vmul.f32 %v386, %v482
          %v484 = vmul.f32 %v387, %v482
          %v485 = vadd.f32 %v480, %v483
          %v486 = vadd.f32 %v481, %v484
          %v487 = vstv %s250
          %v488 = vadd.f32 %v485, %v487
          %v489 = vadd.f32 %v486, %v487
          %v490 = vmax.f32 %v488, 0.0
          %v491 = vmax.f32 %v489, 0.0
          %v492 = vstv %s239
          %v493 = vmul.f32 %v382, %v492
          %v494 = vmul.f32 %v383, %v492
          %v495 = vstv %s240
          %v496 = vmul.f32 %v386, %v495
          %v497 = vmul.f32 %v387, %v495
          %v498 = vadd.f32 %v493, %v496
          %v499 = vadd.f32 %v494, %v497
          %v500 = vstv %s251
          %v501 = vadd.f32 %v498, %v500
          %v502 = vadd.f32 %v499, %v500
          %v503 = vmax.f32 %v501, 0.0
          %v504 = vmax.f32 %v502, 0.0
          %v505 = vstv %s241
          %v506 = vmul.f32 %v382, %v505
          %v507 = vmul.f32 %v383, %v505
          %v508 = vstv %s242
          %v509 = vmul.f32 %v386, %v508
          %v510 = vmul.f32 %v387, %v508
          %v511 = vadd.f32 %v506, %v509
          %v512 = vadd.f32 %v507, %v510
          %v513 = vstv %s252
          %v514 = vadd.f32 %v511, %v513
          %v515 = vadd.f32 %v512, %v513
          %v516 = vmax.f32 %v514, 0.0
          %v517 = vmax.f32 %v515, 0.0
          %v518 = vstv %s373
          %v519 = vadd.f32 %v518, 0.0
          %v520 = vstv %s253
          %v521 = vmul.f32 %v399, %v520
          %v522 = vmul.f32 %v400, %v520
          %v523 = vstv %s254
          %v524 = vmul.f32 %v412, %v523
          %v525 = vmul.f32 %v413, %v523
          %v526 = vadd.f32 %v521, %v524
          %v527 = vadd.f32 %v522, %v525
          %v528 = vstv %s255
          %v529 = vmul.f32 %v425, %v528
          %v530 = vmul.f32 %v426, %v528
          %v531 = vstv %s256
          %v532 = vmul.f32 %v438, %v531
          %v533 = vmul.f32 %v439, %v531
          %v534 = vadd.f32 %v529, %v532
          %v535 = vadd.f32 %v530, %v533
          %v536 = vadd.f32 %v526, %v534
          %v537 = vadd.f32 %v527, %v535
          %v538 = vstv %s257
          %v539 = vmul.f32 %v451, %v538
          %v540 = vmul.f32 %v452, %v538
          %v541 = vadd.f32 %v536, %v539
          %v542 = vadd.f32 %v537, %v540
          %v543 = vstv %s258
          %v544 = vmul.f32 %v464, %v543
          %v545 = vmul.f32 %v465, %v543
          %v546 = vstv %s259
          %v547 = vmul.f32 %v477, %v546
          %v548 = vmul.f32 %v478, %v546
          %v549 = vadd.f32 %v544, %v547
          %v550 = vadd.f32 %v545, %v548
          %v551 = vstv %s260
          %v552 = vmul.f32 %v490, %v551
          %v553 = vmul.f32 %v491, %v551
          %v554 = vstv %s261
          %v555 = vmul.f32 %v503, %v554
          %v556 = vmul.f32 %v504, %v554
          %v557 = vadd.f32 %v552, %v555
          %v558 = vadd.f32 %v553, %v556
          %v559 = vadd.f32 %v549, %v557
          %v560 = vadd.f32 %v550, %v558
          %v561 = vstv %s262
          %v562 = vmul.f32 %v516, %v561
          %v563 = vmul.f32 %v517, %v561
          %v564 = vadd.f32 %v559, %v562
          %v565 = vadd.f32 %v560, %v563
          %v566 = vadd.f32 %v541, %v564
          %v567 = vadd.f32 %v542, %v565
          %v568 = vstv %s353
          %v569 = vadd.f32 %v566, %v568
          %v570 = vadd.f32 %v567, %v568
          %v571 = vmax.f32 %v569, 0.0
          %v572 = vmax.f32 %v570, 0.0
          %v573 = vstv %s363
          %v574 = vmul.f32 %v571, %v573
          %v575 = vmul.f32 %v572, %v573
          %v576 = vadd.f32 %v519, %v574
          %v577 = vadd.f32 %v519, %v575
          %v578 = vstv %s263
          %v579 = vmul.f32 %v399, %v578
          %v580 = vmul.f32 %v400, %v578
          %v581 = vstv %s264
          %v582 = vmul.f32 %v412, %v581
          %v583 = vmul.f32 %v413, %v581
          %v584 = vadd.f32 %v579, %v582
          %v585 = vadd.f32 %v580, %v583
          %v586 = vstv %s265
          %v587 = vmul.f32 %v425, %v586
          %v588 = vmul.f32 %v426, %v586
          %v589 = vstv %s266
          %v590 = vmul.f32 %v438, %v589
          %v591 = vmul.f32 %v439, %v589
          %v592 = vadd.f32 %v587, %v590
          %v593 = vadd.f32 %v588, %v591
          %v594 = vadd.f32 %v584, %v592
          %v595 = vadd.f32 %v585, %v593
          %v596 = vstv %s267
          %v597 = vmul.f32 %v451, %v596
          %v598 = vmul.f32 %v452, %v596
          %v599 = vadd.f32 %v594, %v597
          %v600 = vadd.f32 %v595, %v598
          %v601 = vstv %s268
          %v602 = vmul.f32 %v464, %v601
          %v603 = vmul.f32 %v465, %v601
          %v604 = vstv %s269
          %v605 = vmul.f32 %v477, %v604
          %v606 = vmul.f32 %v478, %v604
          %v607 = vadd.f32 %v602, %v605
          %v608 = vadd.f32 %v603, %v606
          %v609 = vstv %s270
          %v610 = vmul.f32 %v490, %v609
          %v611 = vmul.f32 %v491, %v609
          %v612 = vstv %s271
          %v613 = vmul.f32 %v503, %v612
          %v614 = vmul.f32 %v504, %v612
          %v615 = vadd.f32 %v610, %v613
          %v616 = vadd.f32 %v611, %v614
          %v617 = vadd.f32 %v607, %v615
          %v618 = vadd.f32 %v608, %v616
          %v619 = vstv %s272
          %v620 = vmul.f32 %v516, %v619
          %v621 = vmul.f32 %v517, %v619
          %v622 = vadd.f32 %v617, %v620
          %v623 = vadd.f32 %v618, %v621
          %v624 = vadd.f32 %v599, %v622
          %v625 = vadd.f32 %v600, %v623
          %v626 = vstv %s354
          %v627 = vadd.f32 %v624, %v626
          %v628 = vadd.f32 %v625, %v626
          %v629 = vmax.f32 %v627, 0.0
          %v630 = vmax.f32 %v628, 0.0
          %v631 = vstv %s364
          %v632 = vmul.f32 %v629, %v631
          %v633 = vmul.f32 %v630, %v631
          %v634 = vadd.f32 %v632, 0.0
          %v635 = vadd.f32 %v633, 0.0
          %v636 = vstv %s273
          %v637 = vmul.f32 %v399, %v636
          %v638 = vmul.f32 %v400, %v636
          %v639 = vstv %s274
          %v640 = vmul.f32 %v412, %v639
          %v641 = vmul.f32 %v413, %v639
          %v642 = vadd.f32 %v637, %v640
          %v643 = vadd.f32 %v638, %v641
          %v644 = vstv %s275
          %v645 = vmul.f32 %v425, %v644
          %v646 = vmul.f32 %v426, %v644
          %v647 = vstv %s276
          %v648 = vmul.f32 %v438, %v647
          %v649 = vmul.f32 %v439, %v647
          %v650 = vadd.f32 %v645, %v648
          %v651 = vadd.f32 %v646, %v649
          %v652 = vadd.f32 %v642, %v650
          %v653 = vadd.f32 %v643, %v651
          %v654 = vstv %s277
          %v655 = vmul.f32 %v451, %v654
          %v656 = vmul.f32 %v452, %v654
          %v657 = vadd.f32 %v652, %v655
          %v658 = vadd.f32 %v653, %v656
          %v659 = vstv %s278
          %v660 = vmul.f32 %v464, %v659
          %v661 = vmul.f32 %v465, %v659
          %v662 = vstv %s279
          %v663 = vmul.f32 %v477, %v662
          %v664 = vmul.f32 %v478, %v662
          %v665 = vadd.f32 %v660, %v663
          %v666 = vadd.f32 %v661, %v664
          %v667 = vstv %s280
          %v668 = vmul.f32 %v490, %v667
          %v669 = vmul.f32 %v491, %v667
          %v670 = vstv %s281
          %v671 = vmul.f32 %v503, %v670
          %v672 = vmul.f32 %v504, %v670
          %v673 = vadd.f32 %v668, %v671
          %v674 = vadd.f32 %v669, %v672
          %v675 = vadd.f32 %v665, %v673
          %v676 = vadd.f32 %v666, %v674
          %v677 = vstv %s282
          %v678 = vmul.f32 %v516, %v677
          %v679 = vmul.f32 %v517, %v677
          %v680 = vadd.f32 %v675, %v678
          %v681 = vadd.f32 %v676, %v679
          %v682 = vadd.f32 %v657, %v680
          %v683 = vadd.f32 %v658, %v681
          %v684 = vstv %s355
          %v685 = vadd.f32 %v682, %v684
          %v686 = vadd.f32 %v683, %v684
          %v687 = vmax.f32 %v685, 0.0
          %v688 = vmax.f32 %v686, 0.0
          %v689 = vstv %s365
          %v690 = vmul.f32 %v687, %v689
          %v691 = vmul.f32 %v688, %v689
          %v692 = vadd.f32 %v576, %v690
          %v693 = vadd.f32 %v577, %v691
          %v694 = vstv %s283
          %v695 = vmul.f32 %v399, %v694
          %v696 = vmul.f32 %v400, %v694
          %v697 = vstv %s284
          %v698 = vmul.f32 %v412, %v697
          %v699 = vmul.f32 %v413, %v697
          %v700 = vadd.f32 %v695, %v698
          %v701 = vadd.f32 %v696, %v699
          %v702 = vstv %s285
          %v703 = vmul.f32 %v425, %v702
          %v704 = vmul.f32 %v426, %v702
          %v705 = vstv %s286
          %v706 = vmul.f32 %v438, %v705
          %v707 = vmul.f32 %v439, %v705
          %v708 = vadd.f32 %v703, %v706
          %v709 = vadd.f32 %v704, %v707
          %v710 = vadd.f32 %v700, %v708
          %v711 = vadd.f32 %v701, %v709
          %v712 = vstv %s287
          %v713 = vmul.f32 %v451, %v712
          %v714 = vmul.f32 %v452, %v712
          %v715 = vadd.f32 %v710, %v713
          %v716 = vadd.f32 %v711, %v714
          %v717 = vstv %s288
          %v718 = vmul.f32 %v464, %v717
          %v719 = vmul.f32 %v465, %v717
          %v720 = vstv %s289
          %v721 = vmul.f32 %v477, %v720
          %v722 = vmul.f32 %v478, %v720
          %v723 = vadd.f32 %v718, %v721
          %v724 = vadd.f32 %v719, %v722
          %v725 = vstv %s290
          %v726 = vmul.f32 %v490, %v725
          %v727 = vmul.f32 %v491, %v725
          %v728 = vstv %s291
          %v729 = vmul.f32 %v503, %v728
          %v730 = vmul.f32 %v504, %v728
          %v731 = vadd.f32 %v726, %v729
          %v732 = vadd.f32 %v727, %v730
          %v733 = vadd.f32 %v723, %v731
          %v734 = vadd.f32 %v724, %v732
          %v735 = vstv %s292
          %v736 = vmul.f32 %v516, %v735
          %v737 = vmul.f32 %v517, %v735
          %v738 = vadd.f32 %v733, %v736
          %v739 = vadd.f32 %v734, %v737
          %v740 = vadd.f32 %v715, %v738
          %v741 = vadd.f32 %v716, %v739
          %v742 = vstv %s356
          %v743 = vadd.f32 %v740, %v742
          %v744 = vadd.f32 %v741, %v742
          %v745 = vmax.f32 %v743, 0.0
          %v746 = vmax.f32 %v744, 0.0
          %v747 = vstv %s366
          %v748 = vmul.f32 %v745, %v747
          %v749 = vmul.f32 %v746, %v747
          %v750 = vadd.f32 %v634, %v748
          %v751 = vadd.f32 %v635, %v749
          %v752 = vstv %s293
          %v753 = vmul.f32 %v399, %v752
          %v754 = vmul.f32 %v400, %v752
          %v755 = vstv %s294
          %v756 = vmul.f32 %v412, %v755
          %v757 = vmul.f32 %v413, %v755
          %v758 = vadd.f32 %v753, %v756
          %v759 = vadd.f32 %v754, %v757
          %v760 = vstv %s295
          %v761 = vmul.f32 %v425, %v760
          %v762 = vmul.f32 %v426, %v760
          %v763 = vstv %s296
          %v764 = vmul.f32 %v438, %v763
          %v765 = vmul.f32 %v439, %v763
          %v766 = vadd.f32 %v761, %v764
          %v767 = vadd.f32 %v762, %v765
          %v768 = vadd.f32 %v758, %v766
          %v769 = vadd.f32 %v759, %v767
          %v770 = vstv %s297
          %v771 = vmul.f32 %v451, %v770
          %v772 = vmul.f32 %v452, %v770
          %v773 = vadd.f32 %v768, %v771
          %v774 = vadd.f32 %v769, %v772
          %v775 = vstv %s298
          %v776 = vmul.f32 %v464, %v775
          %v777 = vmul.f32 %v465, %v775
          %v778 = vstv %s299
          %v779 = vmul.f32 %v477, %v778
          %v780 = vmul.f32 %v478, %v778
          %v781 = vadd.f32 %v776, %v779
          %v782 = vadd.f32 %v777, %v780
          %v783 = vstv %s300
          %v784 = vmul.f32 %v490, %v783
          %v785 = vmul.f32 %v491, %v783
          %v786 = vstv %s301
          %v787 = vmul.f32 %v503, %v786
          %v788 = vmul.f32 %v504, %v786
          %v789 = vadd.f32 %v784, %v787
          %v790 = vadd.f32 %v785, %v788
          %v791 = vadd.f32 %v781, %v789
          %v792 = vadd.f32 %v782, %v790
          %v793 = vstv %s302
          %v794 = vmul.f32 %v516, %v793
          %v795 = vmul.f32 %v517, %v793
          %v796 = vadd.f32 %v791, %v794
          %v797 = vadd.f32 %v792, %v795
          %v798 = vadd.f32 %v773, %v796
          %v799 = vadd.f32 %v774, %v797
          %v800 = vstv %s357
          %v801 = vadd.f32 %v798, %v800
          %v802 = vadd.f32 %v799, %v800
          %v803 = vmax.f32 %v801, 0.0
          %v804 = vmax.f32 %v802, 0.0
          %v805 = vstv %s367
          %v806 = vmul.f32 %v803, %v805
          %v807 = vmul.f32 %v804, %v805
          %v808 = vadd.f32 %v692, %v806
          %v809 = vadd.f32 %v693, %v807
          %v810 = vstv %s303
          %v811 = vmul.f32 %v399, %v810
          %v812 = vmul.f32 %v400, %v810
          %v813 = vstv %s304
          %v814 = vmul.f32 %v412, %v813
          %v815 = vmul.f32 %v413, %v813
          %v816 = vadd.f32 %v811, %v814
          %v817 = vadd.f32 %v812, %v815
          %v818 = vstv %s305
          %v819 = vmul.f32 %v425, %v818
          %v820 = vmul.f32 %v426, %v818
          %v821 = vstv %s306
          %v822 = vmul.f32 %v438, %v821
          %v823 = vmul.f32 %v439, %v821
          %v824 = vadd.f32 %v819, %v822
          %v825 = vadd.f32 %v820, %v823
          %v826 = vadd.f32 %v816, %v824
          %v827 = vadd.f32 %v817, %v825
          %v828 = vstv %s307
          %v829 = vmul.f32 %v451, %v828
          %v830 = vmul.f32 %v452, %v828
          %v831 = vadd.f32 %v826, %v829
          %v832 = vadd.f32 %v827, %v830
          %v833 = vstv %s308
          %v834 = vmul.f32 %v464, %v833
          %v835 = vmul.f32 %v465, %v833
          %v836 = vstv %s309
          %v837 = vmul.f32 %v477, %v836
          %v838 = vmul.f32 %v478, %v836
          %v839 = vadd.f32 %v834, %v837
          %v840 = vadd.f32 %v835, %v838
          %v841 = vstv %s310
          %v842 = vmul.f32 %v490, %v841
          %v843 = vmul.f32 %v491, %v841
          %v844 = vstv %s311
          %v845 = vmul.f32 %v503, %v844
          %v846 = vmul.f32 %v504, %v844
          %v847 = vadd.f32 %v842, %v845
          %v848 = vadd.f32 %v843, %v846
          %v849 = vadd.f32 %v839, %v847
          %v850 = vadd.f32 %v840, %v848
          %v851 = vstv %s312
          %v852 = vmul.f32 %v516, %v851
          %v853 = vmul.f32 %v517, %v851
          %v854 = vadd.f32 %v849, %v852
          %v855 = vadd.f32 %v850, %v853
          %v856 = vadd.f32 %v831, %v854
          %v857 = vadd.f32 %v832, %v855
          %v858 = vstv %s358
          %v859 = vadd.f32 %v856, %v858
          %v860 = vadd.f32 %v857, %v858
          %v861 = vmax.f32 %v859, 0.0
          %v862 = vmax.f32 %v860, 0.0
          %v863 = vstv %s368
          %v864 = vmul.f32 %v861, %v863
          %v865 = vmul.f32 %v862, %v863
          %v866 = vadd.f32 %v750, %v864
          %v867 = vadd.f32 %v751, %v865
          %v868 = vstv %s313
          %v869 = vmul.f32 %v399, %v868
          %v870 = vmul.f32 %v400, %v868
          %v871 = vstv %s314
          %v872 = vmul.f32 %v412, %v871
          %v873 = vmul.f32 %v413, %v871
          %v874 = vadd.f32 %v869, %v872
          %v875 = vadd.f32 %v870, %v873
          %v876 = vstv %s315
          %v877 = vmul.f32 %v425, %v876
          %v878 = vmul.f32 %v426, %v876
          %v879 = vstv %s316
          %v880 = vmul.f32 %v438, %v879
          %v881 = vmul.f32 %v439, %v879
          %v882 = vadd.f32 %v877, %v880
          %v883 = vadd.f32 %v878, %v881
          %v884 = vadd.f32 %v874, %v882
          %v885 = vadd.f32 %v875, %v883
          %v886 = vstv %s317
          %v887 = vmul.f32 %v451, %v886
          %v888 = vmul.f32 %v452, %v886
          %v889 = vadd.f32 %v884, %v887
          %v890 = vadd.f32 %v885, %v888
          %v891 = vstv %s318
          %v892 = vmul.f32 %v464, %v891
          %v893 = vmul.f32 %v465, %v891
          %v894 = vstv %s319
          %v895 = vmul.f32 %v477, %v894
          %v896 = vmul.f32 %v478, %v894
          %v897 = vadd.f32 %v892, %v895
          %v898 = vadd.f32 %v893, %v896
          %v899 = vstv %s320
          %v900 = vmul.f32 %v490, %v899
          %v901 = vmul.f32 %v491, %v899
          %v902 = vstv %s321
          %v903 = vmul.f32 %v503, %v902
          %v904 = vmul.f32 %v504, %v902
          %v905 = vadd.f32 %v900, %v903
          %v906 = vadd.f32 %v901, %v904
          %v907 = vadd.f32 %v897, %v905
          %v908 = vadd.f32 %v898, %v906
          %v909 = vstv %s322
          %v910 = vmul.f32 %v516, %v909
          %v911 = vmul.f32 %v517, %v909
          %v912 = vadd.f32 %v907, %v910
          %v913 = vadd.f32 %v908, %v911
          %v914 = vadd.f32 %v889, %v912
          %v915 = vadd.f32 %v890, %v913
          %v916 = vstv %s359
          %v917 = vadd.f32 %v914, %v916
          %v918 = vadd.f32 %v915, %v916
          %v919 = vmax.f32 %v917, 0.0
          %v920 = vmax.f32 %v918, 0.0
          %v921 = vstv %s369
          %v922 = vmul.f32 %v919, %v921
          %v923 = vmul.f32 %v920, %v921
          %v924 = vadd.f32 %v808, %v922
          %v925 = vadd.f32 %v809, %v923
          %v926 = vstv %s323
          %v927 = vmul.f32 %v399, %v926
          %v928 = vmul.f32 %v400, %v926
          %v929 = vstv %s324
          %v930 = vmul.f32 %v412, %v929
          %v931 = vmul.f32 %v413, %v929
          %v932 = vadd.f32 %v927, %v930
          %v933 = vadd.f32 %v928, %v931
          %v934 = vstv %s325
          %v935 = vmul.f32 %v425, %v934
          %v936 = vmul.f32 %v426, %v934
          %v937 = vstv %s326
          %v938 = vmul.f32 %v438, %v937
          %v939 = vmul.f32 %v439, %v937
          %v940 = vadd.f32 %v935, %v938
          %v941 = vadd.f32 %v936, %v939
          %v942 = vadd.f32 %v932, %v940
          %v943 = vadd.f32 %v933, %v941
          %v944 = vstv %s327
          %v945 = vmul.f32 %v451, %v944
          %v946 = vmul.f32 %v452, %v944
          %v947 = vadd.f32 %v942, %v945
          %v948 = vadd.f32 %v943, %v946
          %v949 = vstv %s328
          %v950 = vmul.f32 %v464, %v949
          %v951 = vmul.f32 %v465, %v949
          %v952 = vstv %s329
          %v953 = vmul.f32 %v477, %v952
          %v954 = vmul.f32 %v478, %v952
          %v955 = vadd.f32 %v950, %v953
          %v956 = vadd.f32 %v951, %v954
          %v957 = vstv %s330
          %v958 = vmul.f32 %v490, %v957
          %v959 = vmul.f32 %v491, %v957
          %v960 = vstv %s331
          %v961 = vmul.f32 %v503, %v960
          %v962 = vmul.f32 %v504, %v960
          %v963 = vadd.f32 %v958, %v961
          %v964 = vadd.f32 %v959, %v962
          %v965 = vadd.f32 %v955, %v963
          %v966 = vadd.f32 %v956, %v964
          %v967 = vstv %s332
          %v968 = vmul.f32 %v516, %v967
          %v969 = vmul.f32 %v517, %v967
          %v970 = vadd.f32 %v965, %v968
          %v971 = vadd.f32 %v966, %v969
          %v972 = vadd.f32 %v947, %v970
          %v973 = vadd.f32 %v948, %v971
          %v974 = vstv %s360
          %v975 = vadd.f32 %v972, %v974
          %v976 = vadd.f32 %v973, %v974
          %v977 = vmax.f32 %v975, 0.0
          %v978 = vmax.f32 %v976, 0.0
          %v979 = vstv %s370
          %v980 = vmul.f32 %v977, %v979
          %v981 = vmul.f32 %v978, %v979
          %v982 = vadd.f32 %v866, %v980
          %v983 = vadd.f32 %v867, %v981
          %v984 = vstv %s333
          %v985 = vmul.f32 %v399, %v984
          %v986 = vmul.f32 %v400, %v984
          %v987 = vstv %s334
          %v988 = vmul.f32 %v412, %v987
          %v989 = vmul.f32 %v413, %v987
          %v990 = vadd.f32 %v985, %v988
          %v991 = vadd.f32 %v986, %v989
          %v992 = vstv %s335
          %v993 = vmul.f32 %v425, %v992
          %v994 = vmul.f32 %v426, %v992
          %v995 = vstv %s336
          %v996 = vmul.f32 %v438, %v995
          %v997 = vmul.f32 %v439, %v995
          %v998 = vadd.f32 %v993, %v996
          %v999 = vadd.f32 %v994, %v997
          %v1000 = vadd.f32 %v990, %v998
          %v1001 = vadd.f32 %v991, %v999
          %v1002 = vstv %s337
          %v1003 = vmul.f32 %v451, %v1002
          %v1004 = vmul.f32 %v452, %v1002
          %v1005 = vadd.f32 %v1000, %v1003
          %v1006 = vadd.f32 %v1001, %v1004
          %v1007 = vstv %s338
          %v1008 = vmul.f32 %v464, %v1007
          %v1009 = vmul.f32 %v465, %v1007
          %v1010 = vstv %s339
          %v1011 = vmul.f32 %v477, %v1010
          %v1012 = vmul.f32 %v478, %v1010
          %v1013 = vadd.f32 %v1008, %v1011
          %v1014 = vadd.f32 %v1009, %v1012
          %v1015 = vstv %s340
          %v1016 = vmul.f32 %v490, %v1015
          %v1017 = vmul.f32 %v491, %v1015
          %v1018 = vstv %s341
          %v1019 = vmul.f32 %v503, %v1018
          %v1020 = vmul.f32 %v504, %v1018
          %v1021 = vadd.f32 %v1016, %v1019
          %v1022 = vadd.f32 %v1017, %v1020
          %v1023 = vadd.f32 %v1013, %v1021
          %v1024 = vadd.f32 %v1014, %v1022
          %v1025 = vstv %s342
          %v1026 = vmul.f32 %v516, %v1025
          %v1027 = vmul.f32 %v517, %v1025
          %v1028 = vadd.f32 %v1023, %v1026
          %v1029 = vadd.f32 %v1024, %v1027
          %v1030 = vadd.f32 %v1005, %v1028
          %v1031 = vadd.f32 %v1006, %v1029
          %v1032 = vstv %s361
          %v1033 = vadd.f32 %v1030, %v1032
          %v1034 = vadd.f32 %v1031, %v1032
          %v1035 = vmax.f32 %v1033, 0.0
          %v1036 = vmax.f32 %v1034, 0.0
          %v1037 = vstv %s371
          %v1038 = vmul.f32 %v1035, %v1037
          %v1039 = vmul.f32 %v1036, %v1037
          %v1040 = vadd.f32 %v924, %v1038
          %v1041 = vadd.f32 %v925, %v1039
          %v1042 = vstv %s343
          %v1043 = vmul.f32 %v399, %v1042
          %v1044 = vmul.f32 %v400, %v1042
          %v1045 = vstv %s344
          %v1046 = vmul.f32 %v412, %v1045
          %v1047 = vmul.f32 %v413, %v1045
          %v1048 = vadd.f32 %v1043, %v1046
          %v1049 = vadd.f32 %v1044, %v1047
          %v1050 = vstv %s345
          %v1051 = vmul.f32 %v425, %v1050
          %v1052 = vmul.f32 %v426, %v1050
          %v1053 = vstv %s346
          %v1054 = vmul.f32 %v438, %v1053
          %v1055 = vmul.f32 %v439, %v1053
          %v1056 = vadd.f32 %v1051, %v1054
          %v1057 = vadd.f32 %v1052, %v1055
          %v1058 = vadd.f32 %v1048, %v1056
          %v1059 = vadd.f32 %v1049, %v1057
          %v1060 = vstv %s347
          %v1061 = vmul.f32 %v451, %v1060
          %v1062 = vmul.f32 %v452, %v1060
          %v1063 = vadd.f32 %v1058, %v1061
          %v1064 = vadd.f32 %v1059, %v1062
          %v1065 = vstv %s348
          %v1066 = vmul.f32 %v464, %v1065
          %v1067 = vmul.f32 %v465, %v1065
          %v1068 = vstv %s349
          %v1069 = vmul.f32 %v477, %v1068
          %v1070 = vmul.f32 %v478, %v1068
          %v1071 = vadd.f32 %v1066, %v1069
          %v1072 = vadd.f32 %v1067, %v1070
          %v1073 = vstv %s350
          %v1074 = vmul.f32 %v490, %v1073
          %v1075 = vmul.f32 %v491, %v1073
          %v1076 = vstv %s351
          %v1077 = vmul.f32 %v503, %v1076
          %v1078 = vmul.f32 %v504, %v1076
          %v1079 = vadd.f32 %v1074, %v1077
          %v1080 = vadd.f32 %v1075, %v1078
          %v1081 = vadd.f32 %v1071, %v1079
          %v1082 = vadd.f32 %v1072, %v1080
          %v1083 = vstv %s352
          %v1084 = vmul.f32 %v516, %v1083
          %v1085 = vmul.f32 %v517, %v1083
          %v1086 = vadd.f32 %v1081, %v1084
          %v1087 = vadd.f32 %v1082, %v1085
          %v1088 = vadd.f32 %v1063, %v1086
          %v1089 = vadd.f32 %v1064, %v1087
          %v1090 = vstv %s362
          %v1091 = vadd.f32 %v1088, %v1090
          %v1092 = vadd.f32 %v1089, %v1090
          %v1093 = vmax.f32 %v1091, 0.0
          %v1094 = vmax.f32 %v1092, 0.0
          %v1095 = vstv %s372
          %v1096 = vmul.f32 %v1093, %v1095
          %v1097 = vmul.f32 %v1094, %v1095
          %v1098 = vadd.f32 %v982, %v1096
          %v1099 = vadd.f32 %v983, %v1097
          %v1100 = vadd.f32 %v1040, %v1098
          %v1101 = vadd.f32 %v1041, %v1099
          %v1102 = vtanh.pop %v1100
          %v1103 = vtanh.pop %v1101
          %v1104 = vmul.f32 %v1102, 0.5
          %v1105 = vmul.f32 %v1103, 0.5
          %v1106 = vadd.f32 %v1104, 0.5
          %v1107 = vadd.f32 %v1105, 0.5
          %s1108 = scalar_lea.vmem %s221, %s380
          %1109 = vst [vmem:[%s1108] sm:$0xff] %v1106
          %1110 = vst [vmem:[%s1108 + $0x8] sm:$0xff] %v1107
        $region75: #{priority_classifier.1} parent=61 // loop_footer
          %s379 = sadd.s32 1, %s375
        $region76: #{priority_classifier.1} parent=61 // loop_footer_branch
          %374 = sbr.rel target = $region72
        $region77: #{priority_classifier.1} parent=61 // loop_exit
          _
        %s1111 = smul.u32 4, %s14
        %p1112 = scmp.lt.s32.totalorder %s1111, 7
        %s1113 = scalar_select %p1112, %s1111, 7
        %s1114 = smul.addr %s1113, 8
        %s1115 = scalar_lea.vmem %s2, %s1114
        // Predicated region
        $region78: #{priority_classifier.1} parent=61 // pred_check
          %p1116 = pneg %p79
        $region79: #{priority_classifier.1} parent=61 // pred_check_branch
          %1118 = sbr.rel (%p1116) target = $region81
        $region80: #{priority_classifier.1} parent=61 // pred_region
          %s1119 = smul.u32 4, %s14
        $region81: #{priority_classifier.1} parent=61 // pred_fallthru
          _
      $region62: #{priority_classifier.1} parent=5 // pred_fallthru
        _
      %p1120 = scmp.le.s32.totalorder 2, %s9
      // Predicated region
      $region82: #{priority_classifier.1} parent=5 // pred_check
        %p1121 = pneg %p1120
      $region83: #{priority_classifier.1} parent=5 // pred_check_branch
        %1123 = sbr.rel (%p1121) target = $region85
      $region84: #{priority_classifier.1} parent=5 // pred_region
        %s1124 = ssub.s32 %s9, 2
        // Predicated region
        $region86: #{priority_classifier.1} parent=84 // pred_check
          %p1125 = pneg %p85
        $region87: #{priority_classifier.1} parent=84 // pred_check_branch
          %1127 = sbr.rel (%p1125) target = $region89
        $region88: #{priority_classifier.1} parent=84 // pred_region
          %s1128 = smul.u32 4, %s15
          %p1129 = scmp.lt.s32.totalorder %s1128, 7
          %s1130 = scalar_select %p1129, %s1128, 7
          %s1131 = smul.addr %s1130, 8
          %s1132 = scalar_lea.vmem %s2, %s1131
        $region89: #{priority_classifier.1} parent=84 // pred_fallthru
          _
      $region85: #{priority_classifier.1} parent=5 // pred_fallthru
        _
    $region6: #{priority_classifier.1} parent=1 // loop_footer
      %s13 = sadd.s32 1, %s9
    $region7: #{priority_classifier.1} parent=1 // loop_footer_branch
      %8 = sbr.rel target = $region3
    $region8: #{priority_classifier.1} parent=1 // loop_exit
      _
    %1133 = vsyncpa [#allocation3], 1
    %s1134 = scalar_lea.sflag [#allocation3], 1
    %1135 = vsyncpa %s1134, 1

</llo_original>
